<compile_context>
chip_gen: v7x
topology: tpu7x:2x2x1
jax: 0.10.0
libtpu: 0.0.40
codegen_flags: <defaults>
</compile_context>

<pallas_src>
import functools
import math

import jax
import jax.numpy as jnp
from jax.experimental import pallas as pl
from jax.experimental.pallas import tpu as pltpu


def _convlstm_kernel(x_ref, w_ref, b_ref, cprev_ref, h_ref, c_ref, *,
                     hidden_size, width, tile_rows, ksize):
    # x_ref    : (1, 1, Cin, Lh)   bf16  halo slab, Lh = (Ht+2*pad)*W + 2*pad
    # w_ref    : (K*K, 4*Hd, Cin)  bf16  one (4*Hd, Cin) slab per (ky, kx) tap
    # b_ref    : (4*Hd, 1)         f32   gate bias (broadcast over lanes)
    # cprev_ref: (1, Hd, Mt)       f32   previous cell state (Mt = Ht*W)
    # h_ref/c_ref: (1, Hd, Mt)     f32   outputs (lane-dense: Mt % 128 == 0)
    Hd, W, K = hidden_size, width, ksize
    pad = (K - 1) // 2
    Mt = tile_rows * W

    x = x_ref[0, 0]                                        # (Cin, Lh)
    col = jax.lax.broadcasted_iota(jnp.int32, (1, Mt), 1) % W

    # In-kernel conv: 9 shifted tap views of the halo slab -> 9 shallow MXU
    # matmuls accumulated in f32.  Tap (ky, kx) of output flat position j is
    # halo element j + ky*W + kx (the wrapper's front zero-pad absorbs -pad).
    acc = jnp.zeros((4 * Hd, Mt), jnp.float32)
    for ky in range(K):
        for kx in range(K):
            off = ky * W + kx
            xs = x[:, off:off + Mt]                        # (Cin, Mt)
            dx = kx - pad
            if dx != 0:
                # zero the columns where the tap falls into width padding
                # (the flat layout would otherwise wrap into the next row).
                valid = jnp.logical_and(col + dx >= 0, col + dx < W)
                xs = jnp.where(valid, xs, jnp.zeros_like(xs))
            acc = acc + jnp.dot(w_ref[ky * K + kx], xs,
                                preferred_element_type=jnp.float32)
    gates = acc + b_ref[...]

    def sigmoid_t(z):                     # 1 EUP op (tanh) instead of exp+recip
        return 0.5 + 0.5 * jnp.tanh(0.5 * z)

    # chunk(4, channel_dim) ordering matches the PyTorch module (i, r, o, g);
    # Hd = 32 rows -> sublane-aligned slices.
    in_gate = sigmoid_t(gates[0 * Hd:1 * Hd, :])
    remember_gate = sigmoid_t(gates[1 * Hd:2 * Hd, :])
    out_gate = sigmoid_t(gates[2 * Hd:3 * Hd, :])
    cell_gate = jnp.tanh(gates[3 * Hd:4 * Hd, :])

    cell = remember_gate * cprev_ref[0] + in_gate * cell_gate
    hidden = out_gate * jnp.tanh(cell)

    h_ref[0] = hidden
    c_ref[0] = cell


def _pick_tile_rows(H, W, batch, max_lanes=8192):
    """Largest divisor Ht of H with Ht*W <= max_lanes and Ht*W % 128 == 0."""
    valid = [h for h in range(1, H + 1)
             if H % h == 0 and h * W <= max_lanes and (h * W) % 128 == 0]
    if not valid:
        # TODO(synk): pad W to a 128-friendly value instead of this
        # masked-store, full-height fallback.
        return H
    best = max(valid)
    # v7x has 2 TensorCores: prefer >= 4 parallel grid steps when batch is small.
    if batch * (H // best) < 4:
        for h in sorted(valid, reverse=True):
            if batch * (H // h) >= 4:
                return h
    return best


def _vmem_limit_bytes():
    """Per-generation VMEM budget: ~3/4 of physical, capped at 100 MiB."""
    try:
        phys = int(pltpu.get_tpu_info().vmem_capacity_bytes)
    except Exception:
        phys = 64 * 1024 * 1024          # conservative (v7x) fallback
    return int(max(32 * 1024 * 1024, min(phys * 3 // 4, 100 * 1024 * 1024)))


def conv_lstm_2d(x_nchw, prev_state, weight_oihw, bias, *, hidden_size,
                 kernel_size=3, tile_rows=None):
    """ConvLSTM2d forward. Inputs/outputs are NCHW like the PyTorch module."""
    B, Ci, H, W = x_nchw.shape
    K = kernel_size
    assert K % 2 == 1, "odd kernel_size only"
    pad = (K - 1) // 2
    Hd = hidden_size
    Cin = Ci + Hd

    if prev_state is None:
        zeros = jnp.zeros((B, Hd, H, W), jnp.float32)
        prev_state = (zeros, zeros)
    prev_h, prev_c = prev_state

    Ht = _pick_tile_rows(H, W, B) if tile_rows is None else tile_rows
    assert H % Ht == 0, "tile_rows must divide H"
    nT = H // Ht
    Mt = Ht * W
    assert (Mt % 128 == 0) or (Ht == H), \
        "row tile must give lane-dense (x128) blocks"
    Lh = (Ht + 2 * pad) * W + 2 * pad

    # Stack input & previous hidden; cast to bf16 BEFORE padding / window
    # duplication so every expanded HBM byte is half-width.
    stacked = jnp.concatenate([x_nchw, prev_h], axis=1).astype(jnp.bfloat16)
    xpad = jnp.pad(stacked, ((0, 0), (0, 0), (pad, pad), (0, 0)))  # rows only

    # Overlapping row-halo windows: tile i covers padded rows
    # [i*Ht, i*Ht + Ht + 2*pad) -> only 2*pad duplicated rows per tile.
    halos = jnp.stack(
        [xpad[:, :, i * Ht:i * Ht + Ht + 2 * pad, :] for i in range(nT)],
        axis=1)                                      # (B, nT, Cin, Ht+2p, W)
    halos = halos.reshape(B, nT, Cin, (Ht + 2 * pad) * W)
    # pad one `pad`-wide zero margin at each end so every tap slice is in-bounds
    halos = jnp.pad(halos, ((0, 0), (0, 0), (0, 0), (pad, pad)))   # (B,nT,Cin,Lh)

    # weight OIHW -> (K*K, 4*Hd, Cin): one aligned (4*Hd, Cin) slab per tap.
    w_taps = jnp.transpose(weight_oihw, (2, 3, 0, 1)).reshape(K * K, 4 * Hd, Cin)
    w_taps = w_taps.astype(jnp.bfloat16)
    b2 = bias.reshape(4 * Hd, 1).astype(jnp.float32)

    # NCHW -> (B, Hd, H*W) is a free, channel-major reshape.
    cprev = prev_c.reshape(B, Hd, H * W).astype(jnp.float32)

    kern = functools.partial(_convlstm_kernel, hidden_size=Hd, width=W,
                             tile_rows=Ht, ksize=K)
    h_flat, c_flat = pl.pallas_call(
        kern,
        out_shape=(jax.ShapeDtypeStruct((B, Hd, H * W), jnp.float32),
                   jax.ShapeDtypeStruct((B, Hd, H * W), jnp.float32)),
        grid_spec=pltpu.PrefetchScalarGridSpec(
            num_scalar_prefetch=0,
            grid=(B, nT),
            in_specs=[
                pl.BlockSpec((1, 1, Cin, Lh), lambda b, i: (b, i, 0, 0)),   # halo
                pl.BlockSpec((K * K, 4 * Hd, Cin), lambda b, i: (0, 0, 0)), # weights
                pl.BlockSpec((4 * Hd, 1), lambda b, i: (0, 0)),             # bias
                pl.BlockSpec((1, Hd, Mt), lambda b, i: (b, 0, i)),          # prev cell
            ],
            out_specs=(
                pl.BlockSpec((1, Hd, Mt), lambda b, i: (b, 0, i)),          # hidden
                pl.BlockSpec((1, Hd, Mt), lambda b, i: (b, 0, i)),          # cell
            ),
        ),
        compiler_params=pltpu.CompilerParams(
            dimension_semantics=("parallel", "parallel"),
            vmem_limit_bytes=_vmem_limit_bytes()),
    )(halos, w_taps, b2, cprev)

    hidden = h_flat.reshape(B, Hd, H, W)     # channel-major -> NCHW: free
    cell = c_flat.reshape(B, Hd, H, W)
    return hidden, cell


def _reference_step(x, prev_h, prev_c, weight, bias, *, kernel_size=3):
    """Pure-JAX reference of the PyTorch forward.

    Inputs are pre-rounded to bf16 exactly like the Pallas path feeds the MXU,
    so the comparison isolates structural correctness from bf16 quantization.
    """
    pad = (kernel_size - 1) // 2
    stacked = jnp.concatenate([x, prev_h], axis=1)
    stacked = stacked.astype(jnp.bfloat16).astype(jnp.float32)
    w = weight.astype(jnp.bfloat16).astype(jnp.float32)
    gates = jax.lax.conv_general_dilated(
        stacked, w, window_strides=(1, 1),
        padding=((pad, pad), (pad, pad)),
        dimension_numbers=("NCHW", "OIHW", "NCHW"),
        precision=jax.lax.Precision.HIGHEST)
    gates = gates + bias[None, :, None, None]
    i, r, o, g = jnp.split(gates, 4, axis=1)
    i, r, o = jax.nn.sigmoid(i), jax.nn.sigmoid(r), jax.nn.sigmoid(o)
    g = jnp.tanh(g)
    cell = r * prev_c + i * g
    hidden = o * jnp.tanh(cell)
    return hidden, cell


if __name__ == "__main__":
    B, Ci, H, W = 2, 4, 16, 16
    Hd, K = 32, 3

    key = jax.random.PRNGKey(0)
    k_x1, k_x2, k_w, k_b = jax.random.split(key, 4)

    x1 = jax.random.normal(k_x1, (B, Ci, H, W), jnp.float32)
    x2 = jax.random.normal(k_x2, (B, Ci, H, W), jnp.float32)

    # Deterministic Conv2d-style init: U(-1/sqrt(fan_in), 1/sqrt(fan_in))
    fan_in = (Ci + Hd) * K * K
    bound = 1.0 / math.sqrt(fan_in)
    weight = jax.random.uniform(k_w, (4 * Hd, Ci + Hd, K, K), jnp.float32,
                                -bound, bound)
    bias = jax.random.uniform(k_b, (4 * Hd,), jnp.float32, -bound, bound)

    # Step 1 (prev_state=None) then step 2 feeding the recurrent state back,
    # exercising both the zero-state path and the prev_hidden/prev_cell path.
    # The auto tile picker chooses Ht=8 here, exercising the row-tile grid axis.
    h1, c1 = conv_lstm_2d(x1, None, weight, bias, hidden_size=Hd, kernel_size=K)
    h2, c2 = conv_lstm_2d(x2, (h1, c1), weight, bias,
                          hidden_size=Hd, kernel_size=K)
    jax.block_until_ready((h1, c1, h2, c2))

    zeros = jnp.zeros((B, Hd, H, W), jnp.float32)
    rh1, rc1 = _reference_step(x1, zeros, zeros, weight, bias, kernel_size=K)
    rh2, rc2 = _reference_step(x2, rh1, rc1, weight, bias, kernel_size=K)

    assert h2.shape == (B, Hd, H, W) and c2.shape == (B, Hd, H, W)
    for got, want in ((h1, rh1), (c1, rc1), (h2, rh2), (c2, rc2)):
        err = float(jnp.max(jnp.abs(got - want)))
        assert jnp.allclose(got, want, atol=5e-3, rtol=5e-3), err

    print("KERNEL_OK")
</pallas_src>

<mosaic_0001>
module attributes {stable_mosaic.version = 11 : i64} {
  func.func @_convlstm_kernel(%arg0: i32, %arg1: i32, %arg2: memref<1x1x36x162xbf16, #tpu.memory_space<vmem>>, %arg3: memref<9x128x36xbf16, #tpu.memory_space<vmem>>, %arg4: memref<128x1xf32, #tpu.memory_space<vmem>>, %arg5: memref<1x32x128xf32, #tpu.memory_space<vmem>>, %arg6: memref<1x32x128xf32, #tpu.memory_space<vmem>>, %arg7: memref<1x32x128xf32, #tpu.memory_space<vmem>>) attributes {dimension_semantics = [#tpu.dimension_semantics<parallel>, #tpu.dimension_semantics<parallel>], iteration_bounds = array<i64: 2, 2>, scalar_prefetch = 0 : i64, scratch_operands = 0 : i64, tpu.core_type = #tpu.core_type<tc>, window_params = [{transform_indices = @transform_0, window_bounds = array<i64: 1, 1, 36, 162>}, {pipeline_mode = #tpu.pipeline_mode<synchronous>, transform_indices = @transform_1, window_bounds = array<i64: 9, 128, 36>}, {pipeline_mode = #tpu.pipeline_mode<synchronous>, transform_indices = @transform_2, window_bounds = array<i64: 128, 1>}, {transform_indices = @transform_3, window_bounds = array<i64: 1, 32, 128>}, {transform_indices = @transform_4, window_bounds = array<i64: 1, 32, 128>}, {transform_indices = @transform_5, window_bounds = array<i64: 1, 32, 128>}]} {
    %c0 = arith.constant 0 : index
    %c0_0 = arith.constant 0 : index
    %c0_1 = arith.constant 0 : index
    %c0_2 = arith.constant 0 : index
    %0 = vector.load %arg2[%c0, %c0_0, %c0_1, %c0_2] : memref<1x1x36x162xbf16, #tpu.memory_space<vmem>>, vector<1x1x36x162xbf16>
    %1 = vector.shape_cast %0 : vector<1x1x36x162xbf16> to vector<36x162xbf16>
    %2 = tpu.iota {dimensions = array<i32: 1>} : vector<1x128xi32>
    %c16_i32 = arith.constant 16 : i32
    %c0_i32 = arith.constant 0 : i32
    %3 = arith.cmpi eq, %c16_i32, %c0_i32 : i32
    %c1_i32 = arith.constant 1 : i32
    %4 = arith.select %3, %c1_i32, %c16_i32 : i32
    %5 = vector.broadcast %4 : i32 to vector<1x128xi32>
    %6 = arith.remsi %2, %5 : vector<1x128xi32>
    %c0_i32_3 = arith.constant 0 : i32
    %7 = vector.broadcast %c0_i32_3 : i32 to vector<1x128xi32>
    %8 = arith.cmpi ne, %6, %7 : vector<1x128xi32>
    %c0_i32_4 = arith.constant 0 : i32
    %9 = vector.broadcast %c0_i32_4 : i32 to vector<1x128xi32>
    %10 = arith.cmpi slt, %6, %9 : vector<1x128xi32>
    %c0_i32_5 = arith.constant 0 : i32
    %11 = arith.cmpi slt, %4, %c0_i32_5 : i32
    %12 = vector.broadcast %11 : i1 to vector<1x128xi1>
    %13 = vector.broadcast %12 : vector<1x128xi1> to vector<1x128xi1>
    %14 = arith.xori %10, %13 : vector<1x128xi1>
    %15 = arith.andi %14, %8 : vector<1x128xi1>
    %16 = vector.broadcast %4 : i32 to vector<1x128xi32>
    %17 = arith.addi %6, %16 : vector<1x128xi32>
    %18 = arith.select %15, %17, %6 : vector<1x128xi1>, vector<1x128xi32>
    %cst = arith.constant 0.000000e+00 : f32
    %19 = vector.broadcast %cst : f32 to vector<128x128xf32>
    %20 = vector.extract_strided_slice %1 {offsets = [0, 0], sizes = [36, 128], strides = [1, 1]} : vector<36x162xbf16> to vector<36x128xbf16>
    %c-1_i32 = arith.constant -1 : i32
    %21 = vector.broadcast %c-1_i32 : i32 to vector<1x128xi32>
    %22 = arith.addi %18, %21 : vector<1x128xi32>
    %c0_i32_6 = arith.constant 0 : i32
    %23 = vector.broadcast %c0_i32_6 : i32 to vector<1x128xi32>
    %24 = arith.cmpi sge, %22, %23 : vector<1x128xi32>
    %c-1_i32_7 = arith.constant -1 : i32
    %25 = vector.broadcast %c-1_i32_7 : i32 to vector<1x128xi32>
    %26 = arith.addi %18, %25 : vector<1x128xi32>
    %c16_i32_8 = arith.constant 16 : i32
    %27 = vector.broadcast %c16_i32_8 : i32 to vector<1x128xi32>
    %28 = arith.cmpi slt, %26, %27 : vector<1x128xi32>
    %29 = arith.andi %24, %28 : vector<1x128xi1>
    %cst_9 = arith.constant 0.000000e+00 : bf16
    %30 = vector.broadcast %cst_9 : bf16 to vector<36x128xbf16>
    %31 = vector.shape_cast %29 : vector<1x128xi1> to vector<1x128xi1>
    %32 = vector.broadcast %31 : vector<1x128xi1> to vector<36x128xi1>
    %33 = arith.select %32, %20, %30 : vector<36x128xi1>, vector<36x128xbf16>
    %c0_10 = arith.constant 0 : index
    %c0_11 = arith.constant 0 : index
    %c0_12 = arith.constant 0 : index
    %34 = vector.load %arg3[%c0_10, %c0_11, %c0_12] : memref<9x128x36xbf16, #tpu.memory_space<vmem>>, vector<1x128x36xbf16>
    %35 = vector.shape_cast %34 : vector<1x128x36xbf16> to vector<128x36xbf16>
    %cst_13 = arith.constant dense<0.000000e+00> : vector<128x128xf32>
    %36 = tpu.matmul %35, %33, %cst_13 {dimension_numbers = #tpu.dot_dimension_numbers<[1], [0], [0], [1], [0, 0, 1, 1], [], []>} : vector<128x36xbf16>, vector<36x128xbf16>, vector<128x128xf32> -> vector<128x128xf32>
    %37 = arith.addf %19, %36 : vector<128x128xf32>
    %38 = vector.extract_strided_slice %1 {offsets = [0, 1], sizes = [36, 128], strides = [1, 1]} : vector<36x162xbf16> to vector<36x128xbf16>
    %c1 = arith.constant 1 : index
    %c0_14 = arith.constant 0 : index
    %c0_15 = arith.constant 0 : index
    %39 = vector.load %arg3[%c1, %c0_14, %c0_15] : memref<9x128x36xbf16, #tpu.memory_space<vmem>>, vector<1x128x36xbf16>
    %40 = vector.shape_cast %39 : vector<1x128x36xbf16> to vector<128x36xbf16>
    %cst_16 = arith.constant dense<0.000000e+00> : vector<128x128xf32>
    %41 = tpu.matmul %40, %38, %cst_16 {dimension_numbers = #tpu.dot_dimension_numbers<[1], [0], [0], [1], [0, 0, 1, 1], [], []>} : vector<128x36xbf16>, vector<36x128xbf16>, vector<128x128xf32> -> vector<128x128xf32>
    %42 = arith.addf %37, %41 : vector<128x128xf32>
    %43 = vector.extract_strided_slice %1 {offsets = [0, 2], sizes = [36, 128], strides = [1, 1]} : vector<36x162xbf16> to vector<36x128xbf16>
    %c1_i32_17 = arith.constant 1 : i32
    %44 = vector.broadcast %c1_i32_17 : i32 to vector<1x128xi32>
    %45 = arith.addi %18, %44 : vector<1x128xi32>
    %c0_i32_18 = arith.constant 0 : i32
    %46 = vector.broadcast %c0_i32_18 : i32 to vector<1x128xi32>
    %47 = arith.cmpi sge, %45, %46 : vector<1x128xi32>
    %c1_i32_19 = arith.constant 1 : i32
    %48 = vector.broadcast %c1_i32_19 : i32 to vector<1x128xi32>
    %49 = arith.addi %18, %48 : vector<1x128xi32>
    %c16_i32_20 = arith.constant 16 : i32
    %50 = vector.broadcast %c16_i32_20 : i32 to vector<1x128xi32>
    %51 = arith.cmpi slt, %49, %50 : vector<1x128xi32>
    %52 = arith.andi %47, %51 : vector<1x128xi1>
    %cst_21 = arith.constant 0.000000e+00 : bf16
    %53 = vector.broadcast %cst_21 : bf16 to vector<36x128xbf16>
    %54 = vector.shape_cast %52 : vector<1x128xi1> to vector<1x128xi1>
    %55 = vector.broadcast %54 : vector<1x128xi1> to vector<36x128xi1>
    %56 = arith.select %55, %43, %53 : vector<36x128xi1>, vector<36x128xbf16>
    %c2 = arith.constant 2 : index
    %c0_22 = arith.constant 0 : index
    %c0_23 = arith.constant 0 : index
    %57 = vector.load %arg3[%c2, %c0_22, %c0_23] : memref<9x128x36xbf16, #tpu.memory_space<vmem>>, vector<1x128x36xbf16>
    %58 = vector.shape_cast %57 : vector<1x128x36xbf16> to vector<128x36xbf16>
    %cst_24 = arith.constant dense<0.000000e+00> : vector<128x128xf32>
    %59 = tpu.matmul %58, %56, %cst_24 {dimension_numbers = #tpu.dot_dimension_numbers<[1], [0], [0], [1], [0, 0, 1, 1], [], []>} : vector<128x36xbf16>, vector<36x128xbf16>, vector<128x128xf32> -> vector<128x128xf32>
    %60 = arith.addf %42, %59 : vector<128x128xf32>
    %61 = vector.extract_strided_slice %1 {offsets = [0, 16], sizes = [36, 128], strides = [1, 1]} : vector<36x162xbf16> to vector<36x128xbf16>
    %c-1_i32_25 = arith.constant -1 : i32
    %62 = vector.broadcast %c-1_i32_25 : i32 to vector<1x128xi32>
    %63 = arith.addi %18, %62 : vector<1x128xi32>
    %c0_i32_26 = arith.constant 0 : i32
    %64 = vector.broadcast %c0_i32_26 : i32 to vector<1x128xi32>
    %65 = arith.cmpi sge, %63, %64 : vector<1x128xi32>
    %c-1_i32_27 = arith.constant -1 : i32
    %66 = vector.broadcast %c-1_i32_27 : i32 to vector<1x128xi32>
    %67 = arith.addi %18, %66 : vector<1x128xi32>
    %c16_i32_28 = arith.constant 16 : i32
    %68 = vector.broadcast %c16_i32_28 : i32 to vector<1x128xi32>
    %69 = arith.cmpi slt, %67, %68 : vector<1x128xi32>
    %70 = arith.andi %65, %69 : vector<1x128xi1>
    %cst_29 = arith.constant 0.000000e+00 : bf16
    %71 = vector.broadcast %cst_29 : bf16 to vector<36x128xbf16>
    %72 = vector.shape_cast %70 : vector<1x128xi1> to vector<1x128xi1>
    %73 = vector.broadcast %72 : vector<1x128xi1> to vector<36x128xi1>
    %74 = arith.select %73, %61, %71 : vector<36x128xi1>, vector<36x128xbf16>
    %c3 = arith.constant 3 : index
    %c0_30 = arith.constant 0 : index
    %c0_31 = arith.constant 0 : index
    %75 = vector.load %arg3[%c3, %c0_30, %c0_31] : memref<9x128x36xbf16, #tpu.memory_space<vmem>>, vector<1x128x36xbf16>
    %76 = vector.shape_cast %75 : vector<1x128x36xbf16> to vector<128x36xbf16>
    %cst_32 = arith.constant dense<0.000000e+00> : vector<128x128xf32>
    %77 = tpu.matmul %76, %74, %cst_32 {dimension_numbers = #tpu.dot_dimension_numbers<[1], [0], [0], [1], [0, 0, 1, 1], [], []>} : vector<128x36xbf16>, vector<36x128xbf16>, vector<128x128xf32> -> vector<128x128xf32>
    %78 = arith.addf %60, %77 : vector<128x128xf32>
    %79 = vector.extract_strided_slice %1 {offsets = [0, 17], sizes = [36, 128], strides = [1, 1]} : vector<36x162xbf16> to vector<36x128xbf16>
    %c4 = arith.constant 4 : index
    %c0_33 = arith.constant 0 : index
    %c0_34 = arith.constant 0 : index
    %80 = vector.load %arg3[%c4, %c0_33, %c0_34] : memref<9x128x36xbf16, #tpu.memory_space<vmem>>, vector<1x128x36xbf16>
    %81 = vector.shape_cast %80 : vector<1x128x36xbf16> to vector<128x36xbf16>
    %cst_35 = arith.constant dense<0.000000e+00> : vector<128x128xf32>
    %82 = tpu.matmul %81, %79, %cst_35 {dimension_numbers = #tpu.dot_dimension_numbers<[1], [0], [0], [1], [0, 0, 1, 1], [], []>} : vector<128x36xbf16>, vector<36x128xbf16>, vector<128x128xf32> -> vector<128x128xf32>
    %83 = arith.addf %78, %82 : vector<128x128xf32>
    %84 = vector.extract_strided_slice %1 {offsets = [0, 18], sizes = [36, 128], strides = [1, 1]} : vector<36x162xbf16> to vector<36x128xbf16>
    %c1_i32_36 = arith.constant 1 : i32
    %85 = vector.broadcast %c1_i32_36 : i32 to vector<1x128xi32>
    %86 = arith.addi %18, %85 : vector<1x128xi32>
    %c0_i32_37 = arith.constant 0 : i32
    %87 = vector.broadcast %c0_i32_37 : i32 to vector<1x128xi32>
    %88 = arith.cmpi sge, %86, %87 : vector<1x128xi32>
    %c1_i32_38 = arith.constant 1 : i32
    %89 = vector.broadcast %c1_i32_38 : i32 to vector<1x128xi32>
    %90 = arith.addi %18, %89 : vector<1x128xi32>
    %c16_i32_39 = arith.constant 16 : i32
    %91 = vector.broadcast %c16_i32_39 : i32 to vector<1x128xi32>
    %92 = arith.cmpi slt, %90, %91 : vector<1x128xi32>
    %93 = arith.andi %88, %92 : vector<1x128xi1>
    %cst_40 = arith.constant 0.000000e+00 : bf16
    %94 = vector.broadcast %cst_40 : bf16 to vector<36x128xbf16>
    %95 = vector.shape_cast %93 : vector<1x128xi1> to vector<1x128xi1>
    %96 = vector.broadcast %95 : vector<1x128xi1> to vector<36x128xi1>
    %97 = arith.select %96, %84, %94 : vector<36x128xi1>, vector<36x128xbf16>
    %c5 = arith.constant 5 : index
    %c0_41 = arith.constant 0 : index
    %c0_42 = arith.constant 0 : index
    %98 = vector.load %arg3[%c5, %c0_41, %c0_42] : memref<9x128x36xbf16, #tpu.memory_space<vmem>>, vector<1x128x36xbf16>
    %99 = vector.shape_cast %98 : vector<1x128x36xbf16> to vector<128x36xbf16>
    %cst_43 = arith.constant dense<0.000000e+00> : vector<128x128xf32>
    %100 = tpu.matmul %99, %97, %cst_43 {dimension_numbers = #tpu.dot_dimension_numbers<[1], [0], [0], [1], [0, 0, 1, 1], [], []>} : vector<128x36xbf16>, vector<36x128xbf16>, vector<128x128xf32> -> vector<128x128xf32>
    %101 = arith.addf %83, %100 : vector<128x128xf32>
    %102 = vector.extract_strided_slice %1 {offsets = [0, 32], sizes = [36, 128], strides = [1, 1]} : vector<36x162xbf16> to vector<36x128xbf16>
    %c-1_i32_44 = arith.constant -1 : i32
    %103 = vector.broadcast %c-1_i32_44 : i32 to vector<1x128xi32>
    %104 = arith.addi %18, %103 : vector<1x128xi32>
    %c0_i32_45 = arith.constant 0 : i32
    %105 = vector.broadcast %c0_i32_45 : i32 to vector<1x128xi32>
    %106 = arith.cmpi sge, %104, %105 : vector<1x128xi32>
    %c-1_i32_46 = arith.constant -1 : i32
    %107 = vector.broadcast %c-1_i32_46 : i32 to vector<1x128xi32>
    %108 = arith.addi %18, %107 : vector<1x128xi32>
    %c16_i32_47 = arith.constant 16 : i32
    %109 = vector.broadcast %c16_i32_47 : i32 to vector<1x128xi32>
    %110 = arith.cmpi slt, %108, %109 : vector<1x128xi32>
    %111 = arith.andi %106, %110 : vector<1x128xi1>
    %cst_48 = arith.constant 0.000000e+00 : bf16
    %112 = vector.broadcast %cst_48 : bf16 to vector<36x128xbf16>
    %113 = vector.shape_cast %111 : vector<1x128xi1> to vector<1x128xi1>
    %114 = vector.broadcast %113 : vector<1x128xi1> to vector<36x128xi1>
    %115 = arith.select %114, %102, %112 : vector<36x128xi1>, vector<36x128xbf16>
    %c6 = arith.constant 6 : index
    %c0_49 = arith.constant 0 : index
    %c0_50 = arith.constant 0 : index
    %116 = vector.load %arg3[%c6, %c0_49, %c0_50] : memref<9x128x36xbf16, #tpu.memory_space<vmem>>, vector<1x128x36xbf16>
    %117 = vector.shape_cast %116 : vector<1x128x36xbf16> to vector<128x36xbf16>
    %cst_51 = arith.constant dense<0.000000e+00> : vector<128x128xf32>
    %118 = tpu.matmul %117, %115, %cst_51 {dimension_numbers = #tpu.dot_dimension_numbers<[1], [0], [0], [1], [0, 0, 1, 1], [], []>} : vector<128x36xbf16>, vector<36x128xbf16>, vector<128x128xf32> -> vector<128x128xf32>
    %119 = arith.addf %101, %118 : vector<128x128xf32>
    %120 = vector.extract_strided_slice %1 {offsets = [0, 33], sizes = [36, 128], strides = [1, 1]} : vector<36x162xbf16> to vector<36x128xbf16>
    %c7 = arith.constant 7 : index
    %c0_52 = arith.constant 0 : index
    %c0_53 = arith.constant 0 : index
    %121 = vector.load %arg3[%c7, %c0_52, %c0_53] : memref<9x128x36xbf16, #tpu.memory_space<vmem>>, vector<1x128x36xbf16>
    %122 = vector.shape_cast %121 : vector<1x128x36xbf16> to vector<128x36xbf16>
    %cst_54 = arith.constant dense<0.000000e+00> : vector<128x128xf32>
    %123 = tpu.matmul %122, %120, %cst_54 {dimension_numbers = #tpu.dot_dimension_numbers<[1], [0], [0], [1], [0, 0, 1, 1], [], []>} : vector<128x36xbf16>, vector<36x128xbf16>, vector<128x128xf32> -> vector<128x128xf32>
    %124 = arith.addf %119, %123 : vector<128x128xf32>
    %125 = vector.extract_strided_slice %1 {offsets = [0, 34], sizes = [36, 128], strides = [1, 1]} : vector<36x162xbf16> to vector<36x128xbf16>
    %c1_i32_55 = arith.constant 1 : i32
    %126 = vector.broadcast %c1_i32_55 : i32 to vector<1x128xi32>
    %127 = arith.addi %18, %126 : vector<1x128xi32>
    %c0_i32_56 = arith.constant 0 : i32
    %128 = vector.broadcast %c0_i32_56 : i32 to vector<1x128xi32>
    %129 = arith.cmpi sge, %127, %128 : vector<1x128xi32>
    %c1_i32_57 = arith.constant 1 : i32
    %130 = vector.broadcast %c1_i32_57 : i32 to vector<1x128xi32>
    %131 = arith.addi %18, %130 : vector<1x128xi32>
    %c16_i32_58 = arith.constant 16 : i32
    %132 = vector.broadcast %c16_i32_58 : i32 to vector<1x128xi32>
    %133 = arith.cmpi slt, %131, %132 : vector<1x128xi32>
    %134 = arith.andi %129, %133 : vector<1x128xi1>
    %cst_59 = arith.constant 0.000000e+00 : bf16
    %135 = vector.broadcast %cst_59 : bf16 to vector<36x128xbf16>
    %136 = vector.shape_cast %134 : vector<1x128xi1> to vector<1x128xi1>
    %137 = vector.broadcast %136 : vector<1x128xi1> to vector<36x128xi1>
    %138 = arith.select %137, %125, %135 : vector<36x128xi1>, vector<36x128xbf16>
    %c8 = arith.constant 8 : index
    %c0_60 = arith.constant 0 : index
    %c0_61 = arith.constant 0 : index
    %139 = vector.load %arg3[%c8, %c0_60, %c0_61] : memref<9x128x36xbf16, #tpu.memory_space<vmem>>, vector<1x128x36xbf16>
    %140 = vector.shape_cast %139 : vector<1x128x36xbf16> to vector<128x36xbf16>
    %cst_62 = arith.constant dense<0.000000e+00> : vector<128x128xf32>
    %141 = tpu.matmul %140, %138, %cst_62 {dimension_numbers = #tpu.dot_dimension_numbers<[1], [0], [0], [1], [0, 0, 1, 1], [], []>} : vector<128x36xbf16>, vector<36x128xbf16>, vector<128x128xf32> -> vector<128x128xf32>
    %142 = arith.addf %124, %141 : vector<128x128xf32>
    %c0_63 = arith.constant 0 : index
    %c0_64 = arith.constant 0 : index
    %143 = vector.load %arg4[%c0_63, %c0_64] : memref<128x1xf32, #tpu.memory_space<vmem>>, vector<128x1xf32>
    %144 = vector.broadcast %143 : vector<128x1xf32> to vector<128x128xf32>
    %145 = arith.addf %142, %144 : vector<128x128xf32>
    %146 = vector.extract_strided_slice %145 {offsets = [0, 0], sizes = [32, 128], strides = [1, 1]} : vector<128x128xf32> to vector<32x128xf32>
    %cst_65 = arith.constant 5.000000e-01 : f32
    %147 = vector.broadcast %cst_65 : f32 to vector<32x128xf32>
    %148 = arith.mulf %147, %146 : vector<32x128xf32>
    %149 = math.tanh %148 : vector<32x128xf32>
    %cst_66 = arith.constant 5.000000e-01 : f32
    %150 = vector.broadcast %cst_66 : f32 to vector<32x128xf32>
    %151 = arith.mulf %150, %149 : vector<32x128xf32>
    %cst_67 = arith.constant 5.000000e-01 : f32
    %152 = vector.broadcast %cst_67 : f32 to vector<32x128xf32>
    %153 = arith.addf %152, %151 : vector<32x128xf32>
    %154 = vector.extract_strided_slice %145 {offsets = [32, 0], sizes = [32, 128], strides = [1, 1]} : vector<128x128xf32> to vector<32x128xf32>
    %cst_68 = arith.constant 5.000000e-01 : f32
    %155 = vector.broadcast %cst_68 : f32 to vector<32x128xf32>
    %156 = arith.mulf %155, %154 : vector<32x128xf32>
    %157 = math.tanh %156 : vector<32x128xf32>
    %cst_69 = arith.constant 5.000000e-01 : f32
    %158 = vector.broadcast %cst_69 : f32 to vector<32x128xf32>
    %159 = arith.mulf %158, %157 : vector<32x128xf32>
    %cst_70 = arith.constant 5.000000e-01 : f32
    %160 = vector.broadcast %cst_70 : f32 to vector<32x128xf32>
    %161 = arith.addf %160, %159 : vector<32x128xf32>
    %162 = vector.extract_strided_slice %145 {offsets = [64, 0], sizes = [32, 128], strides = [1, 1]} : vector<128x128xf32> to vector<32x128xf32>
    %cst_71 = arith.constant 5.000000e-01 : f32
    %163 = vector.broadcast %cst_71 : f32 to vector<32x128xf32>
    %164 = arith.mulf %163, %162 : vector<32x128xf32>
    %165 = math.tanh %164 : vector<32x128xf32>
    %cst_72 = arith.constant 5.000000e-01 : f32
    %166 = vector.broadcast %cst_72 : f32 to vector<32x128xf32>
    %167 = arith.mulf %166, %165 : vector<32x128xf32>
    %cst_73 = arith.constant 5.000000e-01 : f32
    %168 = vector.broadcast %cst_73 : f32 to vector<32x128xf32>
    %169 = arith.addf %168, %167 : vector<32x128xf32>
    %170 = vector.extract_strided_slice %145 {offsets = [96, 0], sizes = [32, 128], strides = [1, 1]} : vector<128x128xf32> to vector<32x128xf32>
    %171 = math.tanh %170 : vector<32x128xf32>
    %c0_74 = arith.constant 0 : index
    %c0_75 = arith.constant 0 : index
    %c0_76 = arith.constant 0 : index
    %172 = vector.load %arg5[%c0_74, %c0_75, %c0_76] : memref<1x32x128xf32, #tpu.memory_space<vmem>>, vector<1x32x128xf32>
    %173 = vector.shape_cast %172 : vector<1x32x128xf32> to vector<32x128xf32>
    %174 = arith.mulf %161, %173 : vector<32x128xf32>
    %175 = arith.mulf %153, %171 : vector<32x128xf32>
    %176 = arith.addf %174, %175 : vector<32x128xf32>
    %177 = math.tanh %176 : vector<32x128xf32>
    %178 = arith.mulf %169, %177 : vector<32x128xf32>
    %c0_77 = arith.constant 0 : index
    %c0_78 = arith.constant 0 : index
    %c0_79 = arith.constant 0 : index
    %179 = vector.load %arg6[%c0_77, %c0_78, %c0_79] : memref<1x32x128xf32, #tpu.memory_space<vmem>>, vector<1x32x128xf32>
    %180 = vector.shape_cast %179 : vector<1x32x128xf32> to vector<32x128xf32>
    %181 = vector.shape_cast %178 : vector<32x128xf32> to vector<1x32x128xf32>
    tpu.vector_store %arg6[%c0_77, %c0_78, %c0_79], %181 {strides = array<i32>} : memref<1x32x128xf32, #tpu.memory_space<vmem>>, vector<1x32x128xf32>,
    %c0_80 = arith.constant 0 : index
    %c0_81 = arith.constant 0 : index
    %c0_82 = arith.constant 0 : index
    %182 = vector.load %arg7[%c0_80, %c0_81, %c0_82] : memref<1x32x128xf32, #tpu.memory_space<vmem>>, vector<1x32x128xf32>
    %183 = vector.shape_cast %182 : vector<1x32x128xf32> to vector<32x128xf32>
    %184 = vector.shape_cast %176 : vector<32x128xf32> to vector<1x32x128xf32>
    tpu.vector_store %arg7[%c0_80, %c0_81, %c0_82], %184 {strides = array<i32>} : memref<1x32x128xf32, #tpu.memory_space<vmem>>, vector<1x32x128xf32>,
    return
  }
  func.func @transform_0(%arg0: i32, %arg1: i32) -> (i32, i32, i32, i32) {
    %c0_i32 = arith.constant 0 : i32
    %c0_i32_0 = arith.constant 0 : i32
    %c0_i32_1 = arith.constant 0 : i32
    return %arg0, %arg1, %c0_i32, %c0_i32_0 : i32, i32, i32, i32
  }
  func.func @transform_1(%arg0: i32, %arg1: i32) -> (i32, i32, i32) {
    %c0_i32 = arith.constant 0 : i32
    %c0_i32_0 = arith.constant 0 : i32
    %c0_i32_1 = arith.constant 0 : i32
    %c0_i32_2 = arith.constant 0 : i32
    return %c0_i32, %c0_i32_0, %c0_i32_1 : i32, i32, i32
  }
  func.func @transform_2(%arg0: i32, %arg1: i32) -> (i32, i32) {
    %c0_i32 = arith.constant 0 : i32
    %c0_i32_0 = arith.constant 0 : i32
    %c0_i32_1 = arith.constant 0 : i32
    return %c0_i32, %c0_i32_0 : i32, i32
  }
  func.func @transform_3(%arg0: i32, %arg1: i32) -> (i32, i32, i32) {
    %c0_i32 = arith.constant 0 : i32
    %c0_i32_0 = arith.constant 0 : i32
    return %arg0, %c0_i32, %arg1 : i32, i32, i32
  }
  func.func @transform_4(%arg0: i32, %arg1: i32) -> (i32, i32, i32) {
    %c0_i32 = arith.constant 0 : i32
    %c0_i32_0 = arith.constant 0 : i32
    return %arg0, %c0_i32, %arg1 : i32, i32, i32
  }
  func.func @transform_5(%arg0: i32, %arg1: i32) -> (i32, i32, i32) {
    %c0_i32 = arith.constant 0 : i32
    %c0_i32_0 = arith.constant 0 : i32
    return %arg0, %c0_i32, %arg1 : i32, i32, i32
  }
}

</mosaic_0001>

<llo_original>
// kernel: tpu_custom_call.1
$region0: #{tpu_custom_call.1}
  #allocation0 [shape = 'u32[]', space=smem, size = 0x4, offset = 0x4, fixed_abs, tag = 'smem constant byte address 0x4 - core index']
  #allocation1 [shape = 'u32[144,128]{1,0:T(1,128)}', space=vmem, size = 0x12000, scoped, tag = 'internal scratch']
  %s0 = inlined_call_operand.vmem [shape: bf16[2,2,36,162], index: 0, kind: input, shape index: {}]
  %s1 = inlined_call_operand.vmem [shape: bf16[9,128,36], index: 1, kind: input, shape index: {}]
  %s2 = inlined_call_operand.vmem [shape: f32[128,1], index: 2, kind: input, shape index: {}]
  %s3 = inlined_call_operand.vmem [shape: f32[2,32,256], index: 3, kind: input, shape index: {}]
  %s4 = inlined_call_operand.hbm [shape: f32[2,32,256], index: 4, kind: output, shape index: {0}]
  %s5 = inlined_call_operand.hbm [shape: f32[2,32,256], index: 5, kind: output, shape index: {1}]
  %6 = xla_tuple %s4, %s5
  %s7 = sld [smem:[#allocation0]]
  $region95: #{tpu_custom_call.1} parent=0
    _
  %s9 = ssub.s32 1, %s7
  %s10 = scalar_select 0, %s9, %s7
  $region1: #{tpu_custom_call.1} parent=0
    #allocation2 [shape = 'u8[32768]{0}', space=vmem, size = 0x8000, scoped, tag = 'input window, operand 3']
    #allocation3 [shape = 'u8[32768]{0}', space=vmem, size = 0x8000, scoped, tag = 'output window, operand 0']
    #allocation4 [shape = 's32[2]{0}', space=sflag, size = 0x8, scoped, tag = 'scoped memory for tpu_custom_call.1']
    #allocation5 [shape = 'u8[32768]{0}', space=vmem, size = 0x8000, scoped, tag = 'output window, operand 1']
    #allocation6 [shape = 's32[2]{0}', space=sflag, size = 0x8, scoped, tag = 'scoped memory for tpu_custom_call.1']
    %11 = vsyncpa [#allocation4], 0
    %s12 = scalar_lea.sflag [#allocation4], 1
    %13 = vsyncpa %s12, 0
    %14 = vsyncpa [#allocation6], 0
    %s15 = scalar_lea.sflag [#allocation6], 1
    %16 = vsyncpa %s15, 0
    loop: start=0, step=1, limit=6
    $region2: #{tpu_custom_call.1} parent=1 // loop_pre_header
      _
    $region3: #{tpu_custom_call.1} parent=1 // loop_header
      %s18 = sphi 0, %s22
      %p19 = scmp.ge.s32.totalorder %s18, 6
      %s25 = sphi 0, %s37
      %s26 = sphi 0, %s33
      %s27 = sphi 0, %s25
      %s28 = sphi 0, %s26
      %s29 = sphi 0, %s27
      %s30 = sphi 0, %s28
      %s42 = sphi 0, %s44
      %s45 = sphi 0, %s42
      %s46 = sphi 0, %s45
      %s62 = sphi 0, %s46
      %s66 = sphi 0, %s66
      %s68 = sphi 0, %s66
      %s69 = sphi 0, %s68
      %s83 = sphi 0, %s69
      %s87 = sphi 0, %s87
      %s89 = sphi 0, %s87
      %s90 = sphi 0, %s89
      %s104 = sphi 0, %s90
      %s112 = sphi 0, %s114
      %s115 = sphi 0, %s112
      %s116 = sphi 0, %s115
      %s132 = sphi 0, %s116
      %s140 = sphi 0, %s142
      %s143 = sphi 0, %s140
      %s144 = sphi 0, %s143
      %s160 = sphi 0, %s144
      %s168 = sphi 0, %s170
      %s171 = sphi 0, %s168
      %s172 = sphi 0, %s171
      %s188 = sphi 0, %s172
    $region4: #{tpu_custom_call.1} parent=1 // loop_header_branch
      %21 = sbr.rel (%p19) target = $region8
    $region5: #{tpu_custom_call.1} parent=1 // loop_body
      %s23 = ssub.s32 %s18, 1
      %s24 = ssub.s32 %s18, 2
      %s31 = sadd.s32 1, %s26
      %p32 = scmp.ge.s32.totalorder %s31, 2
      %s33 = scalar_select %p32, 0, %s31
      %s34 = sadd.s32 1, %s25
      %s35 = scalar_select %p32, %s34, %s25
      %p36 = scmp.ge.s32.totalorder %s35, 2
      %s37 = scalar_select %p36, 0, %s35
      %s38 = ssub.s32 %s25, %s37
      %s39 = ssub.s32 %s26, %s33
      %s40 = sor.u32 %s38, %s39
      %p41 = scmp.eq.s32.totalorder %s40, 0
      %s43 = sadd.s32 %s42, 1
      %s44 = scalar_select %p41, %s42, %s43
      %p47 = pneg %p41
      %p48 = scmp.eq.s32.totalorder %s18, 3
      %p49 = por %p47, %p48
      %p50 = scmp.ne.s32.totalorder %s42, %s45
      %p51 = scmp.eq.s32.totalorder %s18, 0
      %p52 = por %p50, %p51
      %p53 = scmp.ne.s32.totalorder %s42, %s45
      %p54 = scmp.eq.s32.totalorder %s23, 3
      %p55 = por %p53, %p54
      %p56 = scmp.ne.s32.totalorder %s45, %s46
      %p57 = scmp.eq.s32.totalorder %s23, 0
      %p58 = por %p56, %p57
      %p59 = scmp.ne.s32.totalorder %s45, %s46
      %p60 = scmp.eq.s32.totalorder %s24, 3
      %p61 = por %p59, %p60
      %p63 = scmp.ne.s32.totalorder %s46, %s62
      %p64 = scmp.eq.s32.totalorder %s24, 0
      %p65 = por %p63, %p64
      %s67 = sadd.s32 %s66, 1
      %p70 = scmp.eq.s32.totalorder %s18, 3
      %p71 = scmp.ne.s32.totalorder %s66, %s68
      %p72 = scmp.eq.s32.totalorder %s18, 0
      %p73 = por %p71, %p72
      %p74 = scmp.ne.s32.totalorder %s66, %s68
      %p75 = scmp.eq.s32.totalorder %s23, 3
      %p76 = por %p74, %p75
      %p77 = scmp.ne.s32.totalorder %s68, %s69
      %p78 = scmp.eq.s32.totalorder %s23, 0
      %p79 = por %p77, %p78
      %p80 = scmp.ne.s32.totalorder %s68, %s69
      %p81 = scmp.eq.s32.totalorder %s24, 3
      %p82 = por %p80, %p81
      %p84 = scmp.ne.s32.totalorder %s69, %s83
      %p85 = scmp.eq.s32.totalorder %s24, 0
      %p86 = por %p84, %p85
      %s88 = sadd.s32 %s87, 1
      %p91 = scmp.eq.s32.totalorder %s18, 3
      %p92 = scmp.ne.s32.totalorder %s87, %s89
      %p93 = scmp.eq.s32.totalorder %s18, 0
      %p94 = por %p92, %p93
      %p95 = scmp.ne.s32.totalorder %s87, %s89
      %p96 = scmp.eq.s32.totalorder %s23, 3
      %p97 = por %p95, %p96
      %p98 = scmp.ne.s32.totalorder %s89, %s90
      %p99 = scmp.eq.s32.totalorder %s23, 0
      %p100 = por %p98, %p99
      %p101 = scmp.ne.s32.totalorder %s89, %s90
      %p102 = scmp.eq.s32.totalorder %s24, 3
      %p103 = por %p101, %p102
      %p105 = scmp.ne.s32.totalorder %s90, %s104
      %p106 = scmp.eq.s32.totalorder %s24, 0
      %p107 = por %p105, %p106
      %s108 = ssub.s32 %s25, %s37
      %s109 = ssub.s32 %s26, %s33
      %s110 = sor.u32 %s108, %s109
      %p111 = scmp.eq.s32.totalorder %s110, 0
      %s113 = sadd.s32 %s112, 1
      %s114 = scalar_select %p111, %s112, %s113
      %p117 = pneg %p111
      %p118 = scmp.eq.s32.totalorder %s18, 3
      %p119 = por %p117, %p118
      %p120 = scmp.ne.s32.totalorder %s112, %s115
      %p121 = scmp.eq.s32.totalorder %s18, 0
      %p122 = por %p120, %p121
      %p123 = scmp.ne.s32.totalorder %s112, %s115
      %p124 = scmp.eq.s32.totalorder %s23, 3
      %p125 = por %p123, %p124
      %p126 = scmp.ne.s32.totalorder %s115, %s116
      %p127 = scmp.eq.s32.totalorder %s23, 0
      %p128 = por %p126, %p127
      %p129 = scmp.ne.s32.totalorder %s115, %s116
      %p130 = scmp.eq.s32.totalorder %s24, 3
      %p131 = por %p129, %p130
      %p133 = scmp.ne.s32.totalorder %s116, %s132
      %p134 = scmp.eq.s32.totalorder %s24, 0
      %p135 = por %p133, %p134
      %s136 = ssub.s32 %s25, %s37
      %s137 = ssub.s32 %s26, %s33
      %s138 = sor.u32 %s136, %s137
      %p139 = scmp.eq.s32.totalorder %s138, 0
      %s141 = sadd.s32 %s140, 1
      %s142 = scalar_select %p139, %s140, %s141
      %p145 = pneg %p139
      %p146 = scmp.eq.s32.totalorder %s18, 3
      %p147 = por %p145, %p146
      %p148 = scmp.ne.s32.totalorder %s140, %s143
      %p149 = scmp.eq.s32.totalorder %s18, 0
      %p150 = por %p148, %p149
      %p151 = scmp.ne.s32.totalorder %s140, %s143
      %p152 = scmp.eq.s32.totalorder %s23, 3
      %p153 = por %p151, %p152
      %p154 = scmp.ne.s32.totalorder %s143, %s144
      %p155 = scmp.eq.s32.totalorder %s23, 0
      %p156 = por %p154, %p155
      %p157 = scmp.ne.s32.totalorder %s143, %s144
      %p158 = scmp.eq.s32.totalorder %s24, 3
      %p159 = por %p157, %p158
      %p161 = scmp.ne.s32.totalorder %s144, %s160
      %p162 = scmp.eq.s32.totalorder %s24, 0
      %p163 = por %p161, %p162
      %s164 = ssub.s32 %s25, %s37
      %s165 = ssub.s32 %s26, %s33
      %s166 = sor.u32 %s164, %s165
      %p167 = scmp.eq.s32.totalorder %s166, 0
      %s169 = sadd.s32 %s168, 1
      %s170 = scalar_select %p167, %s168, %s169
      %p173 = pneg %p167
      %p174 = scmp.eq.s32.totalorder %s18, 3
      %p175 = por %p173, %p174
      %p176 = scmp.ne.s32.totalorder %s168, %s171
      %p177 = scmp.eq.s32.totalorder %s18, 0
      %p178 = por %p176, %p177
      %p179 = scmp.ne.s32.totalorder %s168, %s171
      %p180 = scmp.eq.s32.totalorder %s23, 3
      %p181 = por %p179, %p180
      %p182 = scmp.ne.s32.totalorder %s171, %s172
      %p183 = scmp.eq.s32.totalorder %s23, 0
      %p184 = por %p182, %p183
      %p185 = scmp.ne.s32.totalorder %s171, %s172
      %p186 = scmp.eq.s32.totalorder %s24, 3
      %p187 = por %p185, %p186
      %p189 = scmp.ne.s32.totalorder %s172, %s188
      %p190 = scmp.eq.s32.totalorder %s24, 0
      %p191 = por %p189, %p190
      %p192 = scmp.le.s32.totalorder 1, %s18
      %p193 = scmp.lt.s32.totalorder %s18, 5
      %p194 = pnand %p192, %p193
      %p195 = pneg %p194
      // Predicated region
      $region9: #{tpu_custom_call.1} parent=5 // pred_check
        _
      $region10: #{tpu_custom_call.1} parent=5 // pred_check_branch
        %197 = sbr.rel (%p194) target = $region12
      $region11: #{tpu_custom_call.1} parent=5 // pred_region
        %s198 = ssub.s32 %s18, 1
        // Predicated region
        $region13: #{tpu_custom_call.1} parent=11 // pred_check
          %p199 = pneg %p79
        $region14: #{tpu_custom_call.1} parent=11 // pred_check_branch
          %201 = sbr.rel (%p199) target = $region16
        $region15: #{tpu_custom_call.1} parent=11 // pred_region
          _
        $region16: #{tpu_custom_call.1} parent=11 // pred_fallthru
          _
        // Predicated region
        $region17: #{tpu_custom_call.1} parent=11 // pred_check
          %p202 = pneg %p100
        $region18: #{tpu_custom_call.1} parent=11 // pred_check_branch
          %204 = sbr.rel (%p202) target = $region20
        $region19: #{tpu_custom_call.1} parent=11 // pred_region
          _
        $region20: #{tpu_custom_call.1} parent=11 // pred_fallthru
          _
      $region12: #{tpu_custom_call.1} parent=5 // pred_fallthru
        _
      %p205 = scmp.lt.s32.totalorder %s18, 4
      // Predicated region
      $region21: #{tpu_custom_call.1} parent=5 // pred_check
        %p206 = pneg %p205
      $region22: #{tpu_custom_call.1} parent=5 // pred_check_branch
        %208 = sbr.rel (%p206) target = $region24
      $region23: #{tpu_custom_call.1} parent=5 // pred_region
        // Predicated region
        $region25: #{tpu_custom_call.1} parent=23 // pred_check
          %p209 = pneg %p52
        $region26: #{tpu_custom_call.1} parent=23 // pred_check_branch
          %211 = sbr.rel (%p209) target = $region28
        $region27: #{tpu_custom_call.1} parent=23 // pred_region
          %p212 = scmp.lt.s32.totalorder %s25, 1
          %s213 = scalar_select %p212, %s25, 1
          %p214 = scmp.lt.s32.totalorder %s26, 1
          %s215 = scalar_select %p214, %s26, 1
          %s216 = smul.addr %s215, 10
          %s217 = smul.addr %s213, 20
          %s218 = sadd.s32 %s216, %s217
          %s219 = smul.addr %s218, 4
          %s220 = scalar_lea.vmem %s0, %s219
        $region28: #{tpu_custom_call.1} parent=23 // pred_fallthru
          _
        // Predicated region
        $region29: #{tpu_custom_call.1} parent=23 // pred_check
          %p221 = pneg %p122
        $region30: #{tpu_custom_call.1} parent=23 // pred_check_branch
          %223 = sbr.rel (%p221) target = $region32
        $region31: #{tpu_custom_call.1} parent=23 // pred_region
          %s224 = sand.u32 %s112, 1
          %s225 = sand.u32 %s112, 1
          %s226 = smul.addr %s225, 32
          %s227 = scalar_lea.vmem [#allocation2], %s226
          %s228 = smul.addr %s25, 8
          %s229 = sadd.s32 %s26, %s228
          %s230 = smul.addr %s229, 8
          %s231 = scalar_lea.vmem %s3, %s230
          // Predicated region
          $region33: #{tpu_custom_call.1} parent=31 // pred_check
            _
          $region34: #{tpu_custom_call.1} parent=31 // pred_check_branch
            %233 = sbr.rel (0) target = $region36
          $region35: #{tpu_custom_call.1} parent=31 // pred_region
            // Predicated region
            $region37: #{tpu_custom_call.1} parent=35 // pred_check
              _
            $region38: #{tpu_custom_call.1} parent=35 // pred_check_branch
              %235 = sbr.rel (0) target = $region40
            $region39: #{tpu_custom_call.1} parent=35 // pred_region
              // Predicated region
              $region52: #{tpu_custom_call.1} parent=39 // pred_check
                _
              $region53: #{tpu_custom_call.1} parent=39 // pred_check_branch
                %256 = sbr.rel (0) target = $region55
              $region54: #{tpu_custom_call.1} parent=39 // pred_region
                loop: start=0, step=1, limit=1
                $region56: #{tpu_custom_call.1} parent=54 // loop_pre_header
                  _
                $region57: #{tpu_custom_call.1} parent=54 // loop_header
                  %s258 = sphi 0, %s262
                  %p259 = scmp.ge.s32.totalorder %s258, 1
                  %s263 = sphi %s231, %s231
                  %s264 = sphi %s227, %s227
                $region58: #{tpu_custom_call.1} parent=54 // loop_header_branch
                  %261 = sbr.rel (%p259) target = $region62
                $region59: #{tpu_custom_call.1} parent=54 // loop_body
                  %v265 = vld [vmem:[%s263] sm:$0xff]
                  %266 = vst [vmem:[%s264] sm:$0xff] %v265
                  %v267 = vld [vmem:[%s263 + $0x10] sm:$0xff]
                  %268 = vst [vmem:[%s264 + $0x8] sm:$0xff] %v267
                  %v269 = vld [vmem:[%s263 + $0x20] sm:$0xff]
                  %270 = vst [vmem:[%s264 + $0x10] sm:$0xff] %v269
                  %v271 = vld [vmem:[%s263 + $0x30] sm:$0xff]
                  %272 = vst [vmem:[%s264 + $0x18] sm:$0xff] %v271
                $region60: #{tpu_custom_call.1} parent=54 // loop_footer
                  %s262 = sadd.s32 1, %s258
                $region61: #{tpu_custom_call.1} parent=54 // loop_footer_branch
                  %257 = sbr.rel target = $region57
                $region62: #{tpu_custom_call.1} parent=54 // loop_exit
                  _
              $region55: #{tpu_custom_call.1} parent=39 // pred_fallthru
                _
              // Predicated region
              $region63: #{tpu_custom_call.1} parent=39 // pred_check
                _
              $region64: #{tpu_custom_call.1} parent=39 // pred_check_branch
                %274 = sbr.rel target = $region66
              $region65: #{tpu_custom_call.1} parent=39 // pred_region
                _
              $region66: #{tpu_custom_call.1} parent=39 // pred_fallthru
                _
            $region40: #{tpu_custom_call.1} parent=35 // pred_fallthru
              _
            // Predicated region
            $region41: #{tpu_custom_call.1} parent=35 // pred_check
              _
            $region42: #{tpu_custom_call.1} parent=35 // pred_check_branch
              %237 = sbr.rel target = $region44
            $region43: #{tpu_custom_call.1} parent=35 // pred_region
              loop: start=0, step=1, limit=1
              $region45: #{tpu_custom_call.1} parent=43 // loop_pre_header
                _
              $region46: #{tpu_custom_call.1} parent=43 // loop_header
                %s240 = sphi 0, %s244
                %p241 = scmp.ge.s32.totalorder %s240, 1
                %s245 = sphi %s231, %s231
                %s246 = sphi %s227, %s227
              $region47: #{tpu_custom_call.1} parent=43 // loop_header_branch
                %243 = sbr.rel (%p241) target = $region51
              $region48: #{tpu_custom_call.1} parent=43 // loop_body
                %v247 = vld [vmem:[%s245] sm:$0xff]
                %248 = vst [vmem:[%s246] sm:$0xff] %v247
                %v249 = vld [vmem:[%s245 + $0x10] sm:$0xff]
                %250 = vst [vmem:[%s246 + $0x8] sm:$0xff] %v249
                %v251 = vld [vmem:[%s245 + $0x20] sm:$0xff]
                %252 = vst [vmem:[%s246 + $0x10] sm:$0xff] %v251
                %v253 = vld [vmem:[%s245 + $0x30] sm:$0xff]
                %254 = vst [vmem:[%s246 + $0x18] sm:$0xff] %v253
              $region49: #{tpu_custom_call.1} parent=43 // loop_footer
                %s244 = sadd.s32 1, %s240
              $region50: #{tpu_custom_call.1} parent=43 // loop_footer_branch
                %239 = sbr.rel target = $region46
              $region51: #{tpu_custom_call.1} parent=43 // loop_exit
                _
            $region44: #{tpu_custom_call.1} parent=35 // pred_fallthru
              _
          $region36: #{tpu_custom_call.1} parent=31 // pred_fallthru
            _
          %275 = vnop
        $region32: #{tpu_custom_call.1} parent=23 // pred_fallthru
          _
      $region24: #{tpu_custom_call.1} parent=5 // pred_fallthru
        _
      %p276 = scmp.le.s32.totalorder 1, %s18
      %p277 = scmp.lt.s32.totalorder %s18, 5
      %p278 = pnand %p276, %p277
      %p279 = pneg %p278
      // Predicated region
      $region67: #{tpu_custom_call.1} parent=5 // pred_check
        _
      $region68: #{tpu_custom_call.1} parent=5 // pred_check_branch
        %281 = sbr.rel (%p278) target = $region70
      $region69: #{tpu_custom_call.1} parent=5 // pred_region
        %s282 = ssub.s32 %s18, 1
        %s283 = sand.u32 %s115, 1
        %s284 = sand.u32 %s115, 1
        %s285 = smul.addr %s284, 32
        %s286 = scalar_lea.vmem [#allocation2], %s285
        // Predicated region
        $region71: #{tpu_custom_call.1} parent=69 // pred_check
          %p287 = pneg %p128
        $region72: #{tpu_custom_call.1} parent=69 // pred_check_branch
          %289 = sbr.rel (%p287) target = $region74
        $region73: #{tpu_custom_call.1} parent=69 // pred_region
          _
        $region74: #{tpu_custom_call.1} parent=69 // pred_fallthru
          _
        %p290 = scmp.lt.s32.totalorder %s27, 1
        %s291 = scalar_select %p290, %s27, 1
        %p292 = scmp.lt.s32.totalorder %s28, 1
        %s293 = scalar_select %p292, %s28, 1
        %s294 = smul.addr %s293, 10
        %s295 = smul.addr %s291, 20
        %s296 = sadd.s32 %s294, %s295
        %s297 = smul.addr %s296, 4
        %s298 = scalar_lea.vmem %s0, %s297
        %p299 = pneg %p58
        %p300 = pneg %p55
        %p301 = pneg %p79
        %p302 = pneg %p76
        %p303 = pneg %p100
        %p304 = pneg %p97
        %s305 = sand.u32 %s115, 1
        %s306 = sand.u32 %s115, 1
        %s307 = smul.addr %s306, 32
        %s308 = scalar_lea.vmem [#allocation2], %s307
        %p309 = pneg %p128
        %p310 = pneg %p125
        %p311 = pneg %p156
        %p312 = pneg %p153
        %s313 = sand.u32 %s143, 1
        %s314 = scalar_lea.sflag [#allocation4], %s313
        %s315 = sand.u32 %s143, 1
        %s316 = smul.addr %s315, 32
        %s317 = scalar_lea.vmem [#allocation3], %s316
        %p318 = pneg %p184
        %p319 = pneg %p181
        %s320 = sand.u32 %s171, 1
        %s321 = scalar_lea.sflag [#allocation6], %s320
        %s322 = sand.u32 %s171, 1
        %s323 = smul.addr %s322, 32
        %s324 = scalar_lea.vmem [#allocation5], %s323
        %p325 = scmp.lt.s32.totalorder %s27, 1
        %s326 = scalar_select %p325, %s27, 1
        %p327 = scmp.lt.s32.totalorder %s28, 1
        %s328 = scalar_select %p327, %s28, 1
        %s329 = smul.addr %s328, 10
        %s330 = smul.addr %s326, 20
        %s331 = sadd.s32 %s329, %s330
        %s332 = smul.addr %s331, 4
        %s333 = scalar_lea.vmem %s0, %s332
        %v337 = vld [vmem:[%s333] sm:$0xff]
        %v338 = vld [vmem:[%s333 + $0x8] sm:$0xff]
        %v339 = vld [vmem:[%s333 + $0x10] sm:$0xff]
        %v340 = vld [vmem:[%s333 + $0x18] sm:$0xff]
        %v341 = vld [vmem:[%s333 + $0x20] sm:$0x33]
        %v342 = vlaneseq
        %v343 = vand.u32 %v342, 127
        %vm344 = vcmp.lt.s32.totalorder %v343, 0
        %v345 = vsub.s32 0, %v343
        %v346 = vsel %vm344, %v345, %v343
        %v347 = vshrl.u32 %v346, 4
        %v348 = vand.u32 %v346, 15
        %v349 = vsub.s32 0, %v348
        %v350 = vsel %vm344, %v349, %v348
        %vm351 = vcmp.ne.s32.totalorder %v350, 0
        %vm352 = vcmp.lt.s32.totalorder %v350, 0
        %vm353 = vmand %vm352, %vm351
        %v354 = vadd.s32 %v350, 16
        %v355 = vsel %vm353, %v354, %v350
        %v356 = vadd.s32 %v355, 4294967295
        %vm357 = vcmp.ge.s32.totalorder %v356, 0
        %vm358 = vcmp.lt.s32.totalorder %v356, 16
        %vm359 = vmand %vm357, %vm358
        %v360 = vsel %vm359, 1, 0
        %vm361 = vcmp.eq.s32.totalorder %v360, 1
        %vm362 = vmpackc.low %vm361, %vm361
        %v363 = vsel %vm362, %v337, 0
        %v364 = vsel %vm362, %v338, 0
        %v365 = vsel %vm362, %v339, 0
        %v366 = vsel %vm362, %v340, 0
        %v367 = vsel %vm362, %v341, 0
        %v368 = vld [vmem:[%s1] sm:$0xf]
        %v369 = vld [vmem:[%s1 + $0x4] sm:$0xf]
        %v370 = vld [vmem:[%s1 + $0x8] sm:$0xf]
        %v371 = vld [vmem:[%s1 + $0xc] sm:$0xf]
        %v372 = vld [vmem:[%s1 + $0x10] sm:$0xf]
        %v373 = vld [vmem:[%s1 + $0x14] sm:$0xf]
        %v374 = vld [vmem:[%s1 + $0x18] sm:$0xf]
        %v375 = vld [vmem:[%s1 + $0x1c] sm:$0xf]
        %v376 = vld [vmem:[%s1 + $0x20] sm:$0xf]
        %v377 = vld [vmem:[%s1 + $0x24] sm:$0xf]
        %v378 = vld [vmem:[%s1 + $0x28] sm:$0xf]
        %v379 = vld [vmem:[%s1 + $0x2c] sm:$0xf]
        %v380 = vld [vmem:[%s1 + $0x30] sm:$0xf]
        %v381 = vld [vmem:[%s1 + $0x34] sm:$0xf]
        %v382 = vld [vmem:[%s1 + $0x38] sm:$0xf]
        %v383 = vld [vmem:[%s1 + $0x3c] sm:$0xf]
        %s384 = scalar_lea.vmem %s1, 64
        %v385 = vld [vmem:[%s384] sm:$0xf]
        %v386 = vld [vmem:[%s384 + $0x4] sm:$0xf]
        %v387 = vld [vmem:[%s384 + $0x8] sm:$0xf]
        %v388 = vld [vmem:[%s384 + $0xc] sm:$0xf]
        %v389 = vld [vmem:[%s384 + $0x10] sm:$0xf]
        %v390 = vld [vmem:[%s384 + $0x14] sm:$0xf]
        %v391 = vld [vmem:[%s384 + $0x18] sm:$0xf]
        %v392 = vld [vmem:[%s384 + $0x1c] sm:$0xf]
        %v393 = vld [vmem:[%s384 + $0x20] sm:$0xf]
        %v394 = vld [vmem:[%s384 + $0x24] sm:$0xf]
        %v395 = vld [vmem:[%s384 + $0x28] sm:$0xf]
        %v396 = vld [vmem:[%s384 + $0x2c] sm:$0xf]
        %v397 = vld [vmem:[%s384 + $0x30] sm:$0xf]
        %v398 = vld [vmem:[%s384 + $0x34] sm:$0xf]
        %v399 = vld [vmem:[%s384 + $0x38] sm:$0xf]
        %v400 = vld [vmem:[%s384 + $0x3c] sm:$0xf]
        %v417 = vunpack.c.l.b16 %v385
        %v418 = vunpack.c.l.b16 %v386
        %v419 = vunpack.c.l.b16 %v387
        %v420 = vunpack.c.l.b16 %v388
        %v421 = vunpack.c.l.b16 %v389
        %v422 = vunpack.c.l.b16 %v390
        %v423 = vunpack.c.l.b16 %v391
        %v424 = vunpack.c.l.b16 %v392
        %v425 = vunpack.c.l.b16 %v393
        %v426 = vunpack.c.l.b16 %v394
        %v427 = vunpack.c.l.b16 %v395
        %v428 = vunpack.c.l.b16 %v396
        %v429 = vunpack.c.l.b16 %v397
        %v430 = vunpack.c.l.b16 %v398
        %v431 = vunpack.c.l.b16 %v399
        %v432 = vunpack.c.l.b16 %v400
        %v433 = vpack.c.b16 %v418, %v417
        %v434 = vpack.c.b16 %v420, %v419
        %v435 = vpack.c.b16 %v422, %v421
        %v436 = vpack.c.b16 %v424, %v423
        %v437 = vpack.c.b16 %v426, %v425
        %v438 = vpack.c.b16 %v428, %v427
        %v439 = vpack.c.b16 %v430, %v429
        %v440 = vpack.c.b16 %v432, %v431
        %v446 = vunpack.c.l.b16 %v337
        %v447 = vunpack.c.h.b16 %v337
        %v448 = vunpack.c.l.b16 %v338
        %v449 = vunpack.c.h.b16 %v338
        %v450 = vunpack.c.l.b16 %v339
        %v451 = vunpack.c.h.b16 %v339
        %v452 = vunpack.c.l.b16 %v340
        %v453 = vunpack.c.h.b16 %v340
        %v454 = vunpack.c.l.b16 %v341
        %v455 = vunpack.c.h.b16 %v341
        %v456 = vpack.c.b16 %v448, %v446
        %v457 = vpack.c.b16 %v449, %v447
        %v458 = vpack.c.b16 %v452, %v450
        %v459 = vpack.c.b16 %v453, %v451
        %v460 = vpack.c.b16 %v454, %v454
        %v461 = vpack.c.b16 %v455, %v455
        %462 = vrot.lane.b32.xlu0 %v456, 127
        %v463 = vpop.permute.xlu0 %462
        %464 = vrot.lane.b32.xlu0 %v457, 127
        %v465 = vpop.permute.xlu0 %464
        %466 = vrot.lane.b32.xlu0 %v458, 127
        %v467 = vpop.permute.xlu0 %466
        %468 = vrot.lane.b32.xlu0 %v459, 127
        %v469 = vpop.permute.xlu0 %468
        %470 = vrot.lane.b32.xlu0 %v460, 127
        %v471 = vpop.permute.xlu0 %470
        %472 = vrot.lane.b32.xlu0 %v461, 127
        %v473 = vpop.permute.xlu0 %472
        %vm474 = vcmask 1039360
        %v475 = vsel %vm474, %v463, %v465
        %v476 = vsel %vm474, %v467, %v469
        %v477 = vsel %vm474, %v471, %v473
        %vm480 = vcmask 293888
        %v482 = vsel %vm480, %v433, 0
        %v485 = vsel %vm480, %v434, 0
        %v488 = vsel %vm480, %v435, 0
        %v491 = vsel %vm480, %v436, 0
        %v494 = vsel %vm480, %v437, 0
        %v497 = vsel %vm480, %v438, 0
        %v500 = vsel %vm480, %v439, 0
        %v503 = vsel %vm480, %v440, 0
        %vm505 = vcmask 1041408
        %v507 = vsel %vm505, %v477, 0
        %509 = vmatprep.subr.bf16.mxu0 0
        %510 = vmatpush1.bf16.msra.mxu0 %v475
        %511 = vmatprep.subr.bf16.mxu0 0
        %512 = vmatpush1.bf16.msra.mxu0 %v476
        %513 = vmatprep.subr.bf16.mxu0 0
        %514 = vmatpush1.bf16.msra.mxu0 %v507
        %515 = vmatprep.subr.bf16.mxu0 0
        %516 = vmatpush1.bf16.msra.mxu0 0
        %517 = vmatprep.subr.bf16.mxu0 0
        %518 = vmatpush1.bf16.msra.mxu0 0
        %519 = vmatprep.subr.bf16.mxu0 0
        %520 = vmatpush1.bf16.msra.mxu0 0
        %521 = vmatprep.subr.bf16.mxu0 0
        %522 = vmatpush1.bf16.msra.mxu0 0
        %523 = vmatprep.subr.bf16.mxu0 0
        %524 = vmatpush1.bf16.msra.mxu0 0
        %525 = vmatprep.subr.bf16.mxu0 0
        %526 = vmatpush1.bf16.msra.mxu0 0
        %527 = vmatprep.subr.bf16.mxu0 0
        %528 = vmatpush1.bf16.msra.mxu0 0
        %529 = vmatprep.subr.bf16.mxu0 0
        %530 = vmatpush1.bf16.msra.mxu0 0
        %531 = vmatprep.subr.bf16.mxu0 0
        %532 = vmatpush1.bf16.msra.mxu0 0
        %533 = vmatprep.subr.bf16.mxu0 0
        %534 = vmatpush1.bf16.msra.mxu0 0
        %535 = vmatprep.subr.bf16.mxu0 0
        %536 = vmatpush1.bf16.msra.mxu0 0
        %537 = vmatprep.subr.bf16.mxu0 0
        %538 = vmatpush1.bf16.msra.mxu0 0
        %539 = vmatprep.subr.bf16.mxu0 0
        %540 = vmatpush1.bf16.msra.mxu0 0
        %541 = vmatprep.mubr.bf16.mxu0 0
        %542 = vmatmul.mubr.bf16.gmra.mrb[0].mxu0 %v482
        %v543 = vpop.f32.mrb[0].mxu0
        %v544 = vadd.f32 0.0, %v543
        %v545 = vpop.f32.mrb[0].mxu0
        %v546 = vpop.f32.mrb[0].mxu0
        %v547 = vadd.f32 0.0, %v546
        %v548 = vpop.f32.mrb[0].mxu0
        %549 = vmatprep.mubr.bf16.mxu0 0
        %550 = vmatmul.mubr.bf16.gmra.mrb[0].mxu0 %v485
        %v551 = vpop.f32.mrb[0].mxu0
        %v552 = vadd.f32 0.0, %v551
        %v553 = vpop.f32.mrb[0].mxu0
        %v554 = vpop.f32.mrb[0].mxu0
        %v555 = vadd.f32 0.0, %v554
        %v556 = vpop.f32.mrb[0].mxu0
        %557 = vmatprep.mubr.bf16.mxu0 0
        %558 = vmatmul.mubr.bf16.gmra.mrb[0].mxu0 %v488
        %v559 = vpop.f32.mrb[0].mxu0
        %v560 = vadd.f32 0.0, %v559
        %v561 = vpop.f32.mrb[0].mxu0
        %v562 = vpop.f32.mrb[0].mxu0
        %v563 = vadd.f32 0.0, %v562
        %v564 = vpop.f32.mrb[0].mxu0
        %565 = vmatprep.mubr.bf16.mxu0 0
        %566 = vmatmul.mubr.bf16.gmra.mrb[0].mxu0 %v491
        %v567 = vpop.f32.mrb[0].mxu0
        %v568 = vadd.f32 0.0, %v567
        %v569 = vpop.f32.mrb[0].mxu0
        %v570 = vpop.f32.mrb[0].mxu0
        %v571 = vadd.f32 0.0, %v570
        %v572 = vpop.f32.mrb[0].mxu0
        %573 = vmatprep.mubr.bf16.mxu0 0
        %574 = vmatmul.mubr.bf16.gmra.mrb[0].mxu0 %v494
        %v575 = vpop.f32.mrb[0].mxu0
        %v576 = vadd.f32 0.0, %v575
        %v577 = vpop.f32.mrb[0].mxu0
        %v578 = vpop.f32.mrb[0].mxu0
        %v579 = vadd.f32 0.0, %v578
        %v580 = vpop.f32.mrb[0].mxu0
        %581 = vmatprep.mubr.bf16.mxu0 0
        %582 = vmatmul.mubr.bf16.gmra.mrb[0].mxu0 %v497
        %v583 = vpop.f32.mrb[0].mxu0
        %v584 = vadd.f32 0.0, %v583
        %v585 = vpop.f32.mrb[0].mxu0
        %v586 = vpop.f32.mrb[0].mxu0
        %v587 = vadd.f32 0.0, %v586
        %v588 = vpop.f32.mrb[0].mxu0
        %589 = vmatprep.mubr.bf16.mxu0 0
        %590 = vmatmul.mubr.bf16.gmra.mrb[0].mxu0 %v500
        %v591 = vpop.f32.mrb[0].mxu0
        %v592 = vadd.f32 0.0, %v591
        %v593 = vpop.f32.mrb[0].mxu0
        %v594 = vpop.f32.mrb[0].mxu0
        %v595 = vadd.f32 0.0, %v594
        %v596 = vpop.f32.mrb[0].mxu0
        %597 = vmatprep.mubr.bf16.mxu0 0
        %598 = vmatmul.mubr.bf16.gmra.mrb[0].mxu0 %v503
        %v599 = vpop.f32.mrb[0].mxu0
        %v600 = vadd.f32 0.0, %v599
        %v601 = vpop.f32.mrb[0].mxu0
        %v602 = vpop.f32.mrb[0].mxu0
        %v603 = vadd.f32 0.0, %v602
        %v604 = vpop.f32.mrb[0].mxu0
        %605 = vdwg.mxu0
        %v622 = vunpack.c.l.b16 %v368
        %v623 = vunpack.c.l.b16 %v369
        %v624 = vunpack.c.l.b16 %v370
        %v625 = vunpack.c.l.b16 %v371
        %v626 = vunpack.c.l.b16 %v372
        %v627 = vunpack.c.l.b16 %v373
        %v628 = vunpack.c.l.b16 %v374
        %v629 = vunpack.c.l.b16 %v375
        %v630 = vunpack.c.l.b16 %v376
        %v631 = vunpack.c.l.b16 %v377
        %v632 = vunpack.c.l.b16 %v378
        %v633 = vunpack.c.l.b16 %v379
        %v634 = vunpack.c.l.b16 %v380
        %v635 = vunpack.c.l.b16 %v381
        %v636 = vunpack.c.l.b16 %v382
        %v637 = vunpack.c.l.b16 %v383
        %v638 = vpack.c.b16 %v623, %v622
        %v639 = vpack.c.b16 %v625, %v624
        %v640 = vpack.c.b16 %v627, %v626
        %v641 = vpack.c.b16 %v629, %v628
        %v642 = vpack.c.b16 %v631, %v630
        %v643 = vpack.c.b16 %v633, %v632
        %v644 = vpack.c.b16 %v635, %v634
        %v645 = vpack.c.b16 %v637, %v636
        %v651 = vunpack.c.l.b16 %v363
        %v652 = vunpack.c.l.b16 %v364
        %v653 = vunpack.c.l.b16 %v365
        %v654 = vunpack.c.l.b16 %v366
        %v655 = vunpack.c.l.b16 %v367
        %v656 = vpack.c.b16 %v652, %v651
        %v657 = vpack.c.b16 %v654, %v653
        %v658 = vpack.c.b16 %v655, %v655
        %v662 = vsel %vm480, %v638, 0
        %v665 = vsel %vm480, %v639, 0
        %v668 = vsel %vm480, %v640, 0
        %v671 = vsel %vm480, %v641, 0
        %v674 = vsel %vm480, %v642, 0
        %v677 = vsel %vm480, %v643, 0
        %v680 = vsel %vm480, %v644, 0
        %v683 = vsel %vm480, %v645, 0
        %v686 = vsel %vm505, %v658, 0
        %688 = vmatprep.subr.bf16.mxu0 0
        %689 = vmatpush1.bf16.msra.mxu0 %v656
        %690 = vmatprep.subr.bf16.mxu0 0
        %691 = vmatpush1.bf16.msra.mxu0 %v657
        %692 = vmatprep.subr.bf16.mxu0 0
        %693 = vmatpush1.bf16.msra.mxu0 %v686
        %694 = vmatprep.subr.bf16.mxu0 0
        %695 = vmatpush1.bf16.msra.mxu0 0
        %696 = vmatprep.subr.bf16.mxu0 0
        %697 = vmatpush1.bf16.msra.mxu0 0
        %698 = vmatprep.subr.bf16.mxu0 0
        %699 = vmatpush1.bf16.msra.mxu0 0
        %700 = vmatprep.subr.bf16.mxu0 0
        %701 = vmatpush1.bf16.msra.mxu0 0
        %702 = vmatprep.subr.bf16.mxu0 0
        %703 = vmatpush1.bf16.msra.mxu0 0
        %704 = vmatprep.subr.bf16.mxu0 0
        %705 = vmatpush1.bf16.msra.mxu0 0
        %706 = vmatprep.subr.bf16.mxu0 0
        %707 = vmatpush1.bf16.msra.mxu0 0
        %708 = vmatprep.subr.bf16.mxu0 0
        %709 = vmatpush1.bf16.msra.mxu0 0
        %710 = vmatprep.subr.bf16.mxu0 0
        %711 = vmatpush1.bf16.msra.mxu0 0
        %712 = vmatprep.subr.bf16.mxu0 0
        %713 = vmatpush1.bf16.msra.mxu0 0
        %714 = vmatprep.subr.bf16.mxu0 0
        %715 = vmatpush1.bf16.msra.mxu0 0
        %716 = vmatprep.subr.bf16.mxu0 0
        %717 = vmatpush1.bf16.msra.mxu0 0
        %718 = vmatprep.subr.bf16.mxu0 0
        %719 = vmatpush1.bf16.msra.mxu0 0
        %720 = vmatprep.mubr.bf16.mxu0 0
        %721 = vmatmul.mubr.bf16.gmra.mrb[0].mxu0 %v662
        %v722 = vpop.f32.mrb[0].mxu0
        %v723 = vadd.f32 %v544, %v722
        %v724 = vpop.f32.mrb[0].mxu0
        %v725 = vpop.f32.mrb[0].mxu0
        %v726 = vadd.f32 %v547, %v725
        %v727 = vpop.f32.mrb[0].mxu0
        %728 = vmatprep.mubr.bf16.mxu0 0
        %729 = vmatmul.mubr.bf16.gmra.mrb[0].mxu0 %v665
        %v730 = vpop.f32.mrb[0].mxu0
        %v731 = vadd.f32 %v552, %v730
        %v732 = vpop.f32.mrb[0].mxu0
        %v733 = vpop.f32.mrb[0].mxu0
        %v734 = vadd.f32 %v555, %v733
        %v735 = vpop.f32.mrb[0].mxu0
        %736 = vmatprep.mubr.bf16.mxu0 0
        %737 = vmatmul.mubr.bf16.gmra.mrb[0].mxu0 %v668
        %v738 = vpop.f32.mrb[0].mxu0
        %v739 = vadd.f32 %v560, %v738
        %v740 = vpop.f32.mrb[0].mxu0
        %v741 = vpop.f32.mrb[0].mxu0
        %v742 = vadd.f32 %v563, %v741
        %v743 = vpop.f32.mrb[0].mxu0
        %744 = vmatprep.mubr.bf16.mxu0 0
        %745 = vmatmul.mubr.bf16.gmra.mrb[0].mxu0 %v671
        %v746 = vpop.f32.mrb[0].mxu0
        %v747 = vadd.f32 %v568, %v746
        %v748 = vpop.f32.mrb[0].mxu0
        %v749 = vpop.f32.mrb[0].mxu0
        %v750 = vadd.f32 %v571, %v749
        %v751 = vpop.f32.mrb[0].mxu0
        %752 = vmatprep.mubr.bf16.mxu0 0
        %753 = vmatmul.mubr.bf16.gmra.mrb[0].mxu0 %v674
        %v754 = vpop.f32.mrb[0].mxu0
        %v755 = vadd.f32 %v576, %v754
        %v756 = vpop.f32.mrb[0].mxu0
        %v757 = vpop.f32.mrb[0].mxu0
        %v758 = vadd.f32 %v579, %v757
        %v759 = vpop.f32.mrb[0].mxu0
        %760 = vmatprep.mubr.bf16.mxu0 0
        %761 = vmatmul.mubr.bf16.gmra.mrb[0].mxu0 %v677
        %v762 = vpop.f32.mrb[0].mxu0
        %v763 = vadd.f32 %v584, %v762
        %v764 = vpop.f32.mrb[0].mxu0
        %v765 = vpop.f32.mrb[0].mxu0
        %v766 = vadd.f32 %v587, %v765
        %v767 = vpop.f32.mrb[0].mxu0
        %768 = vmatprep.mubr.bf16.mxu0 0
        %769 = vmatmul.mubr.bf16.gmra.mrb[0].mxu0 %v680
        %v770 = vpop.f32.mrb[0].mxu0
        %v771 = vadd.f32 %v592, %v770
        %v772 = vpop.f32.mrb[0].mxu0
        %v773 = vpop.f32.mrb[0].mxu0
        %v774 = vadd.f32 %v595, %v773
        %v775 = vpop.f32.mrb[0].mxu0
        %776 = vmatprep.mubr.bf16.mxu0 0
        %777 = vmatmul.mubr.bf16.gmra.mrb[0].mxu0 %v683
        %v778 = vpop.f32.mrb[0].mxu0
        %v779 = vadd.f32 %v600, %v778
        %v780 = vpop.f32.mrb[0].mxu0
        %v781 = vpop.f32.mrb[0].mxu0
        %v782 = vadd.f32 %v603, %v781
        %v783 = vpop.f32.mrb[0].mxu0
        %784 = vdwg.mxu0
        %v785 = vadd.s32 %v355, 1
        %vm786 = vcmp.ge.s32.totalorder %v785, 0
        %vm787 = vcmp.lt.s32.totalorder %v785, 16
        %vm788 = vmand %vm786, %vm787
        %v789 = vsel %vm788, 1, 0
        %vm790 = vcmp.eq.s32.totalorder %v789, 1
        %vm791 = vmpackc.low %vm790, %vm790
        %v792 = vsel %vm791, 65537, 0
        %793 = vrot.lane.b32.xlu0 %v792, 2
        %v794 = vpop.permute.xlu0 %793
        %v795 = vrot.slane %v794, 4
        %vm796 = vcmask 15360
        %v797 = vsel %vm796, %v795, %v794
        %vm798 = vcmp.ne.s16.totalorder %v797, 0
        %v799 = vsel %vm798, %v337, 0
        %v800 = vsel %vm798, %v338, 0
        %v801 = vsel %vm798, %v339, 0
        %v802 = vsel %vm798, %v340, 0
        %v803 = vsel %vm798, %v341, 0
        %s804 = scalar_lea.vmem %s1, 128
        %v805 = vld [vmem:[%s804] sm:$0xf]
        %v806 = vld [vmem:[%s804 + $0x4] sm:$0xf]
        %v807 = vld [vmem:[%s804 + $0x8] sm:$0xf]
        %v808 = vld [vmem:[%s804 + $0xc] sm:$0xf]
        %v809 = vld [vmem:[%s804 + $0x10] sm:$0xf]
        %v810 = vld [vmem:[%s804 + $0x14] sm:$0xf]
        %v811 = vld [vmem:[%s804 + $0x18] sm:$0xf]
        %v812 = vld [vmem:[%s804 + $0x1c] sm:$0xf]
        %v813 = vld [vmem:[%s804 + $0x20] sm:$0xf]
        %v814 = vld [vmem:[%s804 + $0x24] sm:$0xf]
        %v815 = vld [vmem:[%s804 + $0x28] sm:$0xf]
        %v816 = vld [vmem:[%s804 + $0x2c] sm:$0xf]
        %v817 = vld [vmem:[%s804 + $0x30] sm:$0xf]
        %v818 = vld [vmem:[%s804 + $0x34] sm:$0xf]
        %v819 = vld [vmem:[%s804 + $0x38] sm:$0xf]
        %v820 = vld [vmem:[%s804 + $0x3c] sm:$0xf]
        %v837 = vunpack.c.l.b16 %v805
        %v838 = vunpack.c.l.b16 %v806
        %v839 = vunpack.c.l.b16 %v807
        %v840 = vunpack.c.l.b16 %v808
        %v841 = vunpack.c.l.b16 %v809
        %v842 = vunpack.c.l.b16 %v810
        %v843 = vunpack.c.l.b16 %v811
        %v844 = vunpack.c.l.b16 %v812
        %v845 = vunpack.c.l.b16 %v813
        %v846 = vunpack.c.l.b16 %v814
        %v847 = vunpack.c.l.b16 %v815
        %v848 = vunpack.c.l.b16 %v816
        %v849 = vunpack.c.l.b16 %v817
        %v850 = vunpack.c.l.b16 %v818
        %v851 = vunpack.c.l.b16 %v819
        %v852 = vunpack.c.l.b16 %v820
        %v853 = vpack.c.b16 %v838, %v837
        %v854 = vpack.c.b16 %v840, %v839
        %v855 = vpack.c.b16 %v842, %v841
        %v856 = vpack.c.b16 %v844, %v843
        %v857 = vpack.c.b16 %v846, %v845
        %v858 = vpack.c.b16 %v848, %v847
        %v859 = vpack.c.b16 %v850, %v849
        %v860 = vpack.c.b16 %v852, %v851
        %v866 = vunpack.c.l.b16 %v799
        %v867 = vunpack.c.h.b16 %v799
        %v868 = vunpack.c.l.b16 %v800
        %v869 = vunpack.c.h.b16 %v800
        %v870 = vunpack.c.l.b16 %v801
        %v871 = vunpack.c.h.b16 %v801
        %v872 = vunpack.c.l.b16 %v802
        %v873 = vunpack.c.h.b16 %v802
        %v874 = vunpack.c.l.b16 %v803
        %v875 = vunpack.c.h.b16 %v803
        %v876 = vpack.c.b16 %v868, %v866
        %v877 = vpack.c.b16 %v869, %v867
        %v878 = vpack.c.b16 %v872, %v870
        %v879 = vpack.c.b16 %v873, %v871
        %v880 = vpack.c.b16 %v874, %v874
        %v881 = vpack.c.b16 %v875, %v875
        %882 = vrot.lane.b32.xlu0 %v876, 126
        %v883 = vpop.permute.xlu0 %882
        %884 = vrot.lane.b32.xlu0 %v877, 126
        %v885 = vpop.permute.xlu0 %884
        %886 = vrot.lane.b32.xlu0 %v878, 126
        %v887 = vpop.permute.xlu0 %886
        %888 = vrot.lane.b32.xlu0 %v879, 126
        %v889 = vpop.permute.xlu0 %888
        %890 = vrot.lane.b32.xlu0 %v880, 126
        %v891 = vpop.permute.xlu0 %890
        %892 = vrot.lane.b32.xlu0 %v881, 126
        %v893 = vpop.permute.xlu0 %892
        %vm894 = vcmask 1031168
        %v895 = vsel %vm894, %v883, %v885
        %v896 = vsel %vm894, %v887, %v889
        %v897 = vsel %vm894, %v891, %v893
        %v901 = vsel %vm480, %v853, 0
        %v904 = vsel %vm480, %v854, 0
        %v907 = vsel %vm480, %v855, 0
        %v910 = vsel %vm480, %v856, 0
        %v913 = vsel %vm480, %v857, 0
        %v916 = vsel %vm480, %v858, 0
        %v919 = vsel %vm480, %v859, 0
        %v922 = vsel %vm480, %v860, 0
        %v925 = vsel %vm505, %v897, 0
        %927 = vmatprep.subr.bf16.mxu0 0
        %928 = vmatpush1.bf16.msra.mxu0 %v895
        %929 = vmatprep.subr.bf16.mxu0 0
        %930 = vmatpush1.bf16.msra.mxu0 %v896
        %931 = vmatprep.subr.bf16.mxu0 0
        %932 = vmatpush1.bf16.msra.mxu0 %v925
        %933 = vmatprep.subr.bf16.mxu0 0
        %934 = vmatpush1.bf16.msra.mxu0 0
        %935 = vmatprep.subr.bf16.mxu0 0
        %936 = vmatpush1.bf16.msra.mxu0 0
        %937 = vmatprep.subr.bf16.mxu0 0
        %938 = vmatpush1.bf16.msra.mxu0 0
        %939 = vmatprep.subr.bf16.mxu0 0
        %940 = vmatpush1.bf16.msra.mxu0 0
        %941 = vmatprep.subr.bf16.mxu0 0
        %942 = vmatpush1.bf16.msra.mxu0 0
        %943 = vmatprep.subr.bf16.mxu0 0
        %944 = vmatpush1.bf16.msra.mxu0 0
        %945 = vmatprep.subr.bf16.mxu0 0
        %946 = vmatpush1.bf16.msra.mxu0 0
        %947 = vmatprep.subr.bf16.mxu0 0
        %948 = vmatpush1.bf16.msra.mxu0 0
        %949 = vmatprep.subr.bf16.mxu0 0
        %950 = vmatpush1.bf16.msra.mxu0 0
        %951 = vmatprep.subr.bf16.mxu0 0
        %952 = vmatpush1.bf16.msra.mxu0 0
        %953 = vmatprep.subr.bf16.mxu0 0
        %954 = vmatpush1.bf16.msra.mxu0 0
        %955 = vmatprep.subr.bf16.mxu0 0
        %956 = vmatpush1.bf16.msra.mxu0 0
        %957 = vmatprep.subr.bf16.mxu0 0
        %958 = vmatpush1.bf16.msra.mxu0 0
        %959 = vmatprep.mubr.bf16.mxu0 0
        %960 = vmatmul.mubr.bf16.gmra.mrb[0].mxu0 %v901
        %v961 = vpop.f32.mrb[0].mxu0
        %v962 = vadd.f32 0.0, %v961
        %v963 = vpop.f32.mrb[0].mxu0
        %v964 = vpop.f32.mrb[0].mxu0
        %v965 = vadd.f32 0.0, %v964
        %v966 = vpop.f32.mrb[0].mxu0
        %967 = vmatprep.mubr.bf16.mxu0 0
        %968 = vmatmul.mubr.bf16.gmra.mrb[0].mxu0 %v904
        %v969 = vpop.f32.mrb[0].mxu0
        %v970 = vadd.f32 0.0, %v969
        %v971 = vpop.f32.mrb[0].mxu0
        %v972 = vpop.f32.mrb[0].mxu0
        %v973 = vadd.f32 0.0, %v972
        %v974 = vpop.f32.mrb[0].mxu0
        %975 = vmatprep.mubr.bf16.mxu0 0
        %976 = vmatmul.mubr.bf16.gmra.mrb[0].mxu0 %v907
        %v977 = vpop.f32.mrb[0].mxu0
        %v978 = vadd.f32 0.0, %v977
        %v979 = vpop.f32.mrb[0].mxu0
        %v980 = vpop.f32.mrb[0].mxu0
        %v981 = vadd.f32 0.0, %v980
        %v982 = vpop.f32.mrb[0].mxu0
        %983 = vmatprep.mubr.bf16.mxu0 0
        %984 = vmatmul.mubr.bf16.gmra.mrb[0].mxu0 %v910
        %v985 = vpop.f32.mrb[0].mxu0
        %v986 = vadd.f32 0.0, %v985
        %v987 = vpop.f32.mrb[0].mxu0
        %v988 = vpop.f32.mrb[0].mxu0
        %v989 = vadd.f32 0.0, %v988
        %v990 = vpop.f32.mrb[0].mxu0
        %991 = vmatprep.mubr.bf16.mxu0 0
        %992 = vmatmul.mubr.bf16.gmra.mrb[0].mxu0 %v913
        %v993 = vpop.f32.mrb[0].mxu0
        %v994 = vadd.f32 0.0, %v993
        %v995 = vpop.f32.mrb[0].mxu0
        %v996 = vpop.f32.mrb[0].mxu0
        %v997 = vadd.f32 0.0, %v996
        %v998 = vpop.f32.mrb[0].mxu0
        %999 = vmatprep.mubr.bf16.mxu0 0
        %1000 = vmatmul.mubr.bf16.gmra.mrb[0].mxu0 %v916
        %v1001 = vpop.f32.mrb[0].mxu0
        %v1002 = vadd.f32 0.0, %v1001
        %v1003 = vpop.f32.mrb[0].mxu0
        %v1004 = vpop.f32.mrb[0].mxu0
        %v1005 = vadd.f32 0.0, %v1004
        %v1006 = vpop.f32.mrb[0].mxu0
        %1007 = vmatprep.mubr.bf16.mxu0 0
        %1008 = vmatmul.mubr.bf16.gmra.mrb[0].mxu0 %v919
        %v1009 = vpop.f32.mrb[0].mxu0
        %v1010 = vadd.f32 0.0, %v1009
        %v1011 = vpop.f32.mrb[0].mxu0
        %v1012 = vpop.f32.mrb[0].mxu0
        %v1013 = vadd.f32 0.0, %v1012
        %v1014 = vpop.f32.mrb[0].mxu0
        %1015 = vmatprep.mubr.bf16.mxu0 0
        %1016 = vmatmul.mubr.bf16.gmra.mrb[0].mxu0 %v922
        %v1017 = vpop.f32.mrb[0].mxu0
        %v1018 = vadd.f32 0.0, %v1017
        %v1019 = vpop.f32.mrb[0].mxu0
        %v1020 = vpop.f32.mrb[0].mxu0
        %v1021 = vadd.f32 0.0, %v1020
        %v1022 = vpop.f32.mrb[0].mxu0
        %1023 = vdwg.mxu0
        %v1024 = vadd.f32 %v723, %v962
        %v1025 = vadd.f32 %v726, %v965
        %v1026 = vadd.f32 %v731, %v970
        %v1027 = vadd.f32 %v734, %v973
        %v1028 = vadd.f32 %v739, %v978
        %v1029 = vadd.f32 %v742, %v981
        %v1030 = vadd.f32 %v747, %v986
        %v1031 = vadd.f32 %v750, %v989
        %v1032 = vadd.f32 %v755, %v994
        %v1033 = vadd.f32 %v758, %v997
        %v1034 = vadd.f32 %v763, %v1002
        %v1035 = vadd.f32 %v766, %v1005
        %v1036 = vadd.f32 %v771, %v1010
        %v1037 = vadd.f32 %v774, %v1013
        %v1038 = vadd.f32 %v779, %v1018
        %v1039 = vadd.f32 %v782, %v1021
        %v1040 = vsel %vm362, 65537, 0
        %1041 = vrot.lane.b32.xlu0 %v1040, 16
        %v1042 = vpop.permute.xlu0 %1041
        %v1043 = vrot.slane %v1042, 4
        %vm1044 = vcmask 130048
        %v1045 = vsel %vm1044, %v1043, %v1042
        %vm1046 = vcmp.ne.s16.totalorder %v1045, 0
        %v1047 = vsel %vm1046, %v337, 0
        %v1048 = vsel %vm1046, %v338, 0
        %v1049 = vsel %vm1046, %v339, 0
        %v1050 = vsel %vm1046, %v340, 0
        %v1051 = vsel %vm1046, %v341, 0
        %s1052 = scalar_lea.vmem %s1, 192
        %v1053 = vld [vmem:[%s1052] sm:$0xf]
        %v1054 = vld [vmem:[%s1052 + $0x4] sm:$0xf]
        %v1055 = vld [vmem:[%s1052 + $0x8] sm:$0xf]
        %v1056 = vld [vmem:[%s1052 + $0xc] sm:$0xf]
        %v1057 = vld [vmem:[%s1052 + $0x10] sm:$0xf]
        %v1058 = vld [vmem:[%s1052 + $0x14] sm:$0xf]
        %v1059 = vld [vmem:[%s1052 + $0x18] sm:$0xf]
        %v1060 = vld [vmem:[%s1052 + $0x1c] sm:$0xf]
        %v1061 = vld [vmem:[%s1052 + $0x20] sm:$0xf]
        %v1062 = vld [vmem:[%s1052 + $0x24] sm:$0xf]
        %v1063 = vld [vmem:[%s1052 + $0x28] sm:$0xf]
        %v1064 = vld [vmem:[%s1052 + $0x2c] sm:$0xf]
        %v1065 = vld [vmem:[%s1052 + $0x30] sm:$0xf]
        %v1066 = vld [vmem:[%s1052 + $0x34] sm:$0xf]
        %v1067 = vld [vmem:[%s1052 + $0x38] sm:$0xf]
        %v1068 = vld [vmem:[%s1052 + $0x3c] sm:$0xf]
        %v1085 = vunpack.c.l.b16 %v1053
        %v1086 = vunpack.c.l.b16 %v1054
        %v1087 = vunpack.c.l.b16 %v1055
        %v1088 = vunpack.c.l.b16 %v1056
        %v1089 = vunpack.c.l.b16 %v1057
        %v1090 = vunpack.c.l.b16 %v1058
        %v1091 = vunpack.c.l.b16 %v1059
        %v1092 = vunpack.c.l.b16 %v1060
        %v1093 = vunpack.c.l.b16 %v1061
        %v1094 = vunpack.c.l.b16 %v1062
        %v1095 = vunpack.c.l.b16 %v1063
        %v1096 = vunpack.c.l.b16 %v1064
        %v1097 = vunpack.c.l.b16 %v1065
        %v1098 = vunpack.c.l.b16 %v1066
        %v1099 = vunpack.c.l.b16 %v1067
        %v1100 = vunpack.c.l.b16 %v1068
        %v1101 = vpack.c.b16 %v1086, %v1085
        %v1102 = vpack.c.b16 %v1088, %v1087
        %v1103 = vpack.c.b16 %v1090, %v1089
        %v1104 = vpack.c.b16 %v1092, %v1091
        %v1105 = vpack.c.b16 %v1094, %v1093
        %v1106 = vpack.c.b16 %v1096, %v1095
        %v1107 = vpack.c.b16 %v1098, %v1097
        %v1108 = vpack.c.b16 %v1100, %v1099
        %v1114 = vunpack.c.l.b16 %v1047
        %v1115 = vunpack.c.h.b16 %v1047
        %v1116 = vunpack.c.l.b16 %v1048
        %v1117 = vunpack.c.h.b16 %v1048
        %v1118 = vunpack.c.l.b16 %v1049
        %v1119 = vunpack.c.h.b16 %v1049
        %v1120 = vunpack.c.l.b16 %v1050
        %v1121 = vunpack.c.h.b16 %v1050
        %v1122 = vunpack.c.l.b16 %v1051
        %v1123 = vunpack.c.h.b16 %v1051
        %v1124 = vpack.c.b16 %v1116, %v1114
        %v1125 = vpack.c.b16 %v1117, %v1115
        %v1126 = vpack.c.b16 %v1120, %v1118
        %v1127 = vpack.c.b16 %v1121, %v1119
        %v1128 = vpack.c.b16 %v1122, %v1122
        %v1129 = vpack.c.b16 %v1123, %v1123
        %1130 = vrot.lane.b32.xlu0 %v1124, 112
        %v1131 = vpop.permute.xlu0 %1130
        %1132 = vrot.lane.b32.xlu0 %v1125, 112
        %v1133 = vpop.permute.xlu0 %1132
        %1134 = vrot.lane.b32.xlu0 %v1126, 112
        %v1135 = vpop.permute.xlu0 %1134
        %1136 = vrot.lane.b32.xlu0 %v1127, 112
        %v1137 = vpop.permute.xlu0 %1136
        %1138 = vrot.lane.b32.xlu0 %v1128, 112
        %v1139 = vpop.permute.xlu0 %1138
        %1140 = vrot.lane.b32.xlu0 %v1129, 112
        %v1141 = vpop.permute.xlu0 %1140
        %vm1142 = vcmask 916480
        %v1143 = vsel %vm1142, %v1131, %v1133
        %v1144 = vsel %vm1142, %v1135, %v1137
        %v1145 = vsel %vm1142, %v1139, %v1141
        %v1149 = vsel %vm480, %v1101, 0
        %v1152 = vsel %vm480, %v1102, 0
        %v1155 = vsel %vm480, %v1103, 0
        %v1158 = vsel %vm480, %v1104, 0
        %v1161 = vsel %vm480, %v1105, 0
        %v1164 = vsel %vm480, %v1106, 0
        %v1167 = vsel %vm480, %v1107, 0
        %v1170 = vsel %vm480, %v1108, 0
        %v1173 = vsel %vm505, %v1145, 0
        %1175 = vmatprep.subr.bf16.mxu0 0
        %1176 = vmatpush1.bf16.msra.mxu0 %v1143
        %1177 = vmatprep.subr.bf16.mxu0 0
        %1178 = vmatpush1.bf16.msra.mxu0 %v1144
        %1179 = vmatprep.subr.bf16.mxu0 0
        %1180 = vmatpush1.bf16.msra.mxu0 %v1173
        %1181 = vmatprep.subr.bf16.mxu0 0
        %1182 = vmatpush1.bf16.msra.mxu0 0
        %1183 = vmatprep.subr.bf16.mxu0 0
        %1184 = vmatpush1.bf16.msra.mxu0 0
        %1185 = vmatprep.subr.bf16.mxu0 0
        %1186 = vmatpush1.bf16.msra.mxu0 0
        %1187 = vmatprep.subr.bf16.mxu0 0
        %1188 = vmatpush1.bf16.msra.mxu0 0
        %1189 = vmatprep.subr.bf16.mxu0 0
        %1190 = vmatpush1.bf16.msra.mxu0 0
        %1191 = vmatprep.subr.bf16.mxu0 0
        %1192 = vmatpush1.bf16.msra.mxu0 0
        %1193 = vmatprep.subr.bf16.mxu0 0
        %1194 = vmatpush1.bf16.msra.mxu0 0
        %1195 = vmatprep.subr.bf16.mxu0 0
        %1196 = vmatpush1.bf16.msra.mxu0 0
        %1197 = vmatprep.subr.bf16.mxu0 0
        %1198 = vmatpush1.bf16.msra.mxu0 0
        %1199 = vmatprep.subr.bf16.mxu0 0
        %1200 = vmatpush1.bf16.msra.mxu0 0
        %1201 = vmatprep.subr.bf16.mxu0 0
        %1202 = vmatpush1.bf16.msra.mxu0 0
        %1203 = vmatprep.subr.bf16.mxu0 0
        %1204 = vmatpush1.bf16.msra.mxu0 0
        %1205 = vmatprep.subr.bf16.mxu0 0
        %1206 = vmatpush1.bf16.msra.mxu0 0
        %1207 = vmatprep.mubr.bf16.mxu0 0
        %1208 = vmatmul.mubr.bf16.gmra.mrb[0].mxu0 %v1149
        %v1209 = vpop.f32.mrb[0].mxu0
        %v1210 = vadd.f32 0.0, %v1209
        %v1211 = vpop.f32.mrb[0].mxu0
        %v1212 = vpop.f32.mrb[0].mxu0
        %v1213 = vadd.f32 0.0, %v1212
        %v1214 = vpop.f32.mrb[0].mxu0
        %1215 = vmatprep.mubr.bf16.mxu0 0
        %1216 = vmatmul.mubr.bf16.gmra.mrb[0].mxu0 %v1152
        %v1217 = vpop.f32.mrb[0].mxu0
        %v1218 = vadd.f32 0.0, %v1217
        %v1219 = vpop.f32.mrb[0].mxu0
        %v1220 = vpop.f32.mrb[0].mxu0
        %v1221 = vadd.f32 0.0, %v1220
        %v1222 = vpop.f32.mrb[0].mxu0
        %1223 = vmatprep.mubr.bf16.mxu0 0
        %1224 = vmatmul.mubr.bf16.gmra.mrb[0].mxu0 %v1155
        %v1225 = vpop.f32.mrb[0].mxu0
        %v1226 = vadd.f32 0.0, %v1225
        %v1227 = vpop.f32.mrb[0].mxu0
        %v1228 = vpop.f32.mrb[0].mxu0
        %v1229 = vadd.f32 0.0, %v1228
        %v1230 = vpop.f32.mrb[0].mxu0
        %1231 = vmatprep.mubr.bf16.mxu0 0
        %1232 = vmatmul.mubr.bf16.gmra.mrb[0].mxu0 %v1158
        %v1233 = vpop.f32.mrb[0].mxu0
        %v1234 = vadd.f32 0.0, %v1233
        %v1235 = vpop.f32.mrb[0].mxu0
        %v1236 = vpop.f32.mrb[0].mxu0
        %v1237 = vadd.f32 0.0, %v1236
        %v1238 = vpop.f32.mrb[0].mxu0
        %1239 = vmatprep.mubr.bf16.mxu0 0
        %1240 = vmatmul.mubr.bf16.gmra.mrb[0].mxu0 %v1161
        %v1241 = vpop.f32.mrb[0].mxu0
        %v1242 = vadd.f32 0.0, %v1241
        %v1243 = vpop.f32.mrb[0].mxu0
        %v1244 = vpop.f32.mrb[0].mxu0
        %v1245 = vadd.f32 0.0, %v1244
        %v1246 = vpop.f32.mrb[0].mxu0
        %1247 = vmatprep.mubr.bf16.mxu0 0
        %1248 = vmatmul.mubr.bf16.gmra.mrb[0].mxu0 %v1164
        %v1249 = vpop.f32.mrb[0].mxu0
        %v1250 = vadd.f32 0.0, %v1249
        %v1251 = vpop.f32.mrb[0].mxu0
        %v1252 = vpop.f32.mrb[0].mxu0
        %v1253 = vadd.f32 0.0, %v1252
        %v1254 = vpop.f32.mrb[0].mxu0
        %1255 = vmatprep.mubr.bf16.mxu0 0
        %1256 = vmatmul.mubr.bf16.gmra.mrb[0].mxu0 %v1167
        %v1257 = vpop.f32.mrb[0].mxu0
        %v1258 = vadd.f32 0.0, %v1257
        %v1259 = vpop.f32.mrb[0].mxu0
        %v1260 = vpop.f32.mrb[0].mxu0
        %v1261 = vadd.f32 0.0, %v1260
        %v1262 = vpop.f32.mrb[0].mxu0
        %1263 = vmatprep.mubr.bf16.mxu0 0
        %1264 = vmatmul.mubr.bf16.gmra.mrb[0].mxu0 %v1170
        %v1265 = vpop.f32.mrb[0].mxu0
        %v1266 = vadd.f32 0.0, %v1265
        %v1267 = vpop.f32.mrb[0].mxu0
        %v1268 = vpop.f32.mrb[0].mxu0
        %v1269 = vadd.f32 0.0, %v1268
        %v1270 = vpop.f32.mrb[0].mxu0
        %1271 = vdwg.mxu0
        %v1272 = vadd.f32 %v1024, %v1210
        %v1273 = vadd.f32 %v1025, %v1213
        %v1274 = vadd.f32 %v1026, %v1218
        %v1275 = vadd.f32 %v1027, %v1221
        %v1276 = vadd.f32 %v1028, %v1226
        %v1277 = vadd.f32 %v1029, %v1229
        %v1278 = vadd.f32 %v1030, %v1234
        %v1279 = vadd.f32 %v1031, %v1237
        %v1280 = vadd.f32 %v1032, %v1242
        %v1281 = vadd.f32 %v1033, %v1245
        %v1282 = vadd.f32 %v1034, %v1250
        %v1283 = vadd.f32 %v1035, %v1253
        %v1284 = vadd.f32 %v1036, %v1258
        %v1285 = vadd.f32 %v1037, %v1261
        %v1286 = vadd.f32 %v1038, %v1266
        %v1287 = vadd.f32 %v1039, %v1269
        %s1288 = scalar_lea.vmem %s1, 256
        %v1289 = vld [vmem:[%s1288] sm:$0xf]
        %v1290 = vld [vmem:[%s1288 + $0x4] sm:$0xf]
        %v1291 = vld [vmem:[%s1288 + $0x8] sm:$0xf]
        %v1292 = vld [vmem:[%s1288 + $0xc] sm:$0xf]
        %v1293 = vld [vmem:[%s1288 + $0x10] sm:$0xf]
        %v1294 = vld [vmem:[%s1288 + $0x14] sm:$0xf]
        %v1295 = vld [vmem:[%s1288 + $0x18] sm:$0xf]
        %v1296 = vld [vmem:[%s1288 + $0x1c] sm:$0xf]
        %v1297 = vld [vmem:[%s1288 + $0x20] sm:$0xf]
        %v1298 = vld [vmem:[%s1288 + $0x24] sm:$0xf]
        %v1299 = vld [vmem:[%s1288 + $0x28] sm:$0xf]
        %v1300 = vld [vmem:[%s1288 + $0x2c] sm:$0xf]
        %v1301 = vld [vmem:[%s1288 + $0x30] sm:$0xf]
        %v1302 = vld [vmem:[%s1288 + $0x34] sm:$0xf]
        %v1303 = vld [vmem:[%s1288 + $0x38] sm:$0xf]
        %v1304 = vld [vmem:[%s1288 + $0x3c] sm:$0xf]
        %v1321 = vunpack.c.l.b16 %v1289
        %v1322 = vunpack.c.l.b16 %v1290
        %v1323 = vunpack.c.l.b16 %v1291
        %v1324 = vunpack.c.l.b16 %v1292
        %v1325 = vunpack.c.l.b16 %v1293
        %v1326 = vunpack.c.l.b16 %v1294
        %v1327 = vunpack.c.l.b16 %v1295
        %v1328 = vunpack.c.l.b16 %v1296
        %v1329 = vunpack.c.l.b16 %v1297
        %v1330 = vunpack.c.l.b16 %v1298
        %v1331 = vunpack.c.l.b16 %v1299
        %v1332 = vunpack.c.l.b16 %v1300
        %v1333 = vunpack.c.l.b16 %v1301
        %v1334 = vunpack.c.l.b16 %v1302
        %v1335 = vunpack.c.l.b16 %v1303
        %v1336 = vunpack.c.l.b16 %v1304
        %v1337 = vpack.c.b16 %v1322, %v1321
        %v1338 = vpack.c.b16 %v1324, %v1323
        %v1339 = vpack.c.b16 %v1326, %v1325
        %v1340 = vpack.c.b16 %v1328, %v1327
        %v1341 = vpack.c.b16 %v1330, %v1329
        %v1342 = vpack.c.b16 %v1332, %v1331
        %v1343 = vpack.c.b16 %v1334, %v1333
        %v1344 = vpack.c.b16 %v1336, %v1335
        %1345 = vrot.lane.b32.xlu0 %v456, 111
        %v1346 = vpop.permute.xlu0 %1345
        %1347 = vrot.lane.b32.xlu0 %v457, 111
        %v1348 = vpop.permute.xlu0 %1347
        %1349 = vrot.lane.b32.xlu0 %v458, 111
        %v1350 = vpop.permute.xlu0 %1349
        %1351 = vrot.lane.b32.xlu0 %v459, 111
        %v1352 = vpop.permute.xlu0 %1351
        %1353 = vrot.lane.b32.xlu0 %v460, 111
        %v1354 = vpop.permute.xlu0 %1353
        %1355 = vrot.lane.b32.xlu0 %v461, 111
        %v1356 = vpop.permute.xlu0 %1355
        %vm1357 = vcmask 908288
        %v1358 = vsel %vm1357, %v1346, %v1348
        %v1359 = vsel %vm1357, %v1350, %v1352
        %v1360 = vsel %vm1357, %v1354, %v1356
        %v1364 = vsel %vm480, %v1337, 0
        %v1367 = vsel %vm480, %v1338, 0
        %v1370 = vsel %vm480, %v1339, 0
        %v1373 = vsel %vm480, %v1340, 0
        %v1376 = vsel %vm480, %v1341, 0
        %v1379 = vsel %vm480, %v1342, 0
        %v1382 = vsel %vm480, %v1343, 0
        %v1385 = vsel %vm480, %v1344, 0
        %v1388 = vsel %vm505, %v1360, 0
        %1390 = vmatprep.subr.bf16.mxu0 0
        %1391 = vmatpush1.bf16.msra.mxu0 %v1358
        %1392 = vmatprep.subr.bf16.mxu0 0
        %1393 = vmatpush1.bf16.msra.mxu0 %v1359
        %1394 = vmatprep.subr.bf16.mxu0 0
        %1395 = vmatpush1.bf16.msra.mxu0 %v1388
        %1396 = vmatprep.subr.bf16.mxu0 0
        %1397 = vmatpush1.bf16.msra.mxu0 0
        %1398 = vmatprep.subr.bf16.mxu0 0
        %1399 = vmatpush1.bf16.msra.mxu0 0
        %1400 = vmatprep.subr.bf16.mxu0 0
        %1401 = vmatpush1.bf16.msra.mxu0 0
        %1402 = vmatprep.subr.bf16.mxu0 0
        %1403 = vmatpush1.bf16.msra.mxu0 0
        %1404 = vmatprep.subr.bf16.mxu0 0
        %1405 = vmatpush1.bf16.msra.mxu0 0
        %1406 = vmatprep.subr.bf16.mxu0 0
        %1407 = vmatpush1.bf16.msra.mxu0 0
        %1408 = vmatprep.subr.bf16.mxu0 0
        %1409 = vmatpush1.bf16.msra.mxu0 0
        %1410 = vmatprep.subr.bf16.mxu0 0
        %1411 = vmatpush1.bf16.msra.mxu0 0
        %1412 = vmatprep.subr.bf16.mxu0 0
        %1413 = vmatpush1.bf16.msra.mxu0 0
        %1414 = vmatprep.subr.bf16.mxu0 0
        %1415 = vmatpush1.bf16.msra.mxu0 0
        %1416 = vmatprep.subr.bf16.mxu0 0
        %1417 = vmatpush1.bf16.msra.mxu0 0
        %1418 = vmatprep.subr.bf16.mxu0 0
        %1419 = vmatpush1.bf16.msra.mxu0 0
        %1420 = vmatprep.subr.bf16.mxu0 0
        %1421 = vmatpush1.bf16.msra.mxu0 0
        %1422 = vmatprep.mubr.bf16.mxu0 0
        %1423 = vmatmul.mubr.bf16.gmra.mrb[0].mxu0 %v1364
        %v1424 = vpop.f32.mrb[0].mxu0
        %v1425 = vadd.f32 0.0, %v1424
        %v1426 = vpop.f32.mrb[0].mxu0
        %v1427 = vpop.f32.mrb[0].mxu0
        %v1428 = vadd.f32 0.0, %v1427
        %v1429 = vpop.f32.mrb[0].mxu0
        %1430 = vmatprep.mubr.bf16.mxu0 0
        %1431 = vmatmul.mubr.bf16.gmra.mrb[0].mxu0 %v1367
        %v1432 = vpop.f32.mrb[0].mxu0
        %v1433 = vadd.f32 0.0, %v1432
        %v1434 = vpop.f32.mrb[0].mxu0
        %v1435 = vpop.f32.mrb[0].mxu0
        %v1436 = vadd.f32 0.0, %v1435
        %v1437 = vpop.f32.mrb[0].mxu0
        %1438 = vmatprep.mubr.bf16.mxu0 0
        %1439 = vmatmul.mubr.bf16.gmra.mrb[0].mxu0 %v1370
        %v1440 = vpop.f32.mrb[0].mxu0
        %v1441 = vadd.f32 0.0, %v1440
        %v1442 = vpop.f32.mrb[0].mxu0
        %v1443 = vpop.f32.mrb[0].mxu0
        %v1444 = vadd.f32 0.0, %v1443
        %v1445 = vpop.f32.mrb[0].mxu0
        %1446 = vmatprep.mubr.bf16.mxu0 0
        %1447 = vmatmul.mubr.bf16.gmra.mrb[0].mxu0 %v1373
        %v1448 = vpop.f32.mrb[0].mxu0
        %v1449 = vadd.f32 0.0, %v1448
        %v1450 = vpop.f32.mrb[0].mxu0
        %v1451 = vpop.f32.mrb[0].mxu0
        %v1452 = vadd.f32 0.0, %v1451
        %v1453 = vpop.f32.mrb[0].mxu0
        %1454 = vmatprep.mubr.bf16.mxu0 0
        %1455 = vmatmul.mubr.bf16.gmra.mrb[0].mxu0 %v1376
        %v1456 = vpop.f32.mrb[0].mxu0
        %v1457 = vadd.f32 0.0, %v1456
        %v1458 = vpop.f32.mrb[0].mxu0
        %v1459 = vpop.f32.mrb[0].mxu0
        %v1460 = vadd.f32 0.0, %v1459
        %v1461 = vpop.f32.mrb[0].mxu0
        %1462 = vmatprep.mubr.bf16.mxu0 0
        %1463 = vmatmul.mubr.bf16.gmra.mrb[0].mxu0 %v1379
        %v1464 = vpop.f32.mrb[0].mxu0
        %v1465 = vadd.f32 0.0, %v1464
        %v1466 = vpop.f32.mrb[0].mxu0
        %v1467 = vpop.f32.mrb[0].mxu0
        %v1468 = vadd.f32 0.0, %v1467
        %v1469 = vpop.f32.mrb[0].mxu0
        %1470 = vmatprep.mubr.bf16.mxu0 0
        %1471 = vmatmul.mubr.bf16.gmra.mrb[0].mxu0 %v1382
        %v1472 = vpop.f32.mrb[0].mxu0
        %v1473 = vadd.f32 0.0, %v1472
        %v1474 = vpop.f32.mrb[0].mxu0
        %v1475 = vpop.f32.mrb[0].mxu0
        %v1476 = vadd.f32 0.0, %v1475
        %v1477 = vpop.f32.mrb[0].mxu0
        %1478 = vmatprep.mubr.bf16.mxu0 0
        %1479 = vmatmul.mubr.bf16.gmra.mrb[0].mxu0 %v1385
        %v1480 = vpop.f32.mrb[0].mxu0
        %v1481 = vadd.f32 0.0, %v1480
        %v1482 = vpop.f32.mrb[0].mxu0
        %v1483 = vpop.f32.mrb[0].mxu0
        %v1484 = vadd.f32 0.0, %v1483
        %v1485 = vpop.f32.mrb[0].mxu0
        %1486 = vdwg.mxu0
        %v1487 = vadd.f32 %v1272, %v1425
        %v1488 = vadd.f32 %v1273, %v1428
        %v1489 = vadd.f32 %v1274, %v1433
        %v1490 = vadd.f32 %v1275, %v1436
        %v1491 = vadd.f32 %v1276, %v1441
        %v1492 = vadd.f32 %v1277, %v1444
        %v1493 = vadd.f32 %v1278, %v1449
        %v1494 = vadd.f32 %v1279, %v1452
        %v1495 = vadd.f32 %v1280, %v1457
        %v1496 = vadd.f32 %v1281, %v1460
        %v1497 = vadd.f32 %v1282, %v1465
        %v1498 = vadd.f32 %v1283, %v1468
        %v1499 = vadd.f32 %v1284, %v1473
        %v1500 = vadd.f32 %v1285, %v1476
        %v1501 = vadd.f32 %v1286, %v1481
        %v1502 = vadd.f32 %v1287, %v1484
        %1503 = vrot.lane.b32.xlu0 %v792, 18
        %v1504 = vpop.permute.xlu0 %1503
        %v1505 = vrot.slane %v1504, 4
        %vm1506 = vcmask 146432
        %v1507 = vsel %vm1506, %v1505, %v1504
        %vm1508 = vcmp.ne.s16.totalorder %v1507, 0
        %v1509 = vsel %vm1508, %v337, 0
        %v1510 = vsel %vm1508, %v338, 0
        %v1511 = vsel %vm1508, %v339, 0
        %v1512 = vsel %vm1508, %v340, 0
        %v1513 = vsel %vm1508, %v341, 0
        %s1514 = scalar_lea.vmem %s1, 320
        %v1515 = vld [vmem:[%s1514] sm:$0xf]
        %v1516 = vld [vmem:[%s1514 + $0x4] sm:$0xf]
        %v1517 = vld [vmem:[%s1514 + $0x8] sm:$0xf]
        %v1518 = vld [vmem:[%s1514 + $0xc] sm:$0xf]
        %v1519 = vld [vmem:[%s1514 + $0x10] sm:$0xf]
        %v1520 = vld [vmem:[%s1514 + $0x14] sm:$0xf]
        %v1521 = vld [vmem:[%s1514 + $0x18] sm:$0xf]
        %v1522 = vld [vmem:[%s1514 + $0x1c] sm:$0xf]
        %v1523 = vld [vmem:[%s1514 + $0x20] sm:$0xf]
        %v1524 = vld [vmem:[%s1514 + $0x24] sm:$0xf]
        %v1525 = vld [vmem:[%s1514 + $0x28] sm:$0xf]
        %v1526 = vld [vmem:[%s1514 + $0x2c] sm:$0xf]
        %v1527 = vld [vmem:[%s1514 + $0x30] sm:$0xf]
        %v1528 = vld [vmem:[%s1514 + $0x34] sm:$0xf]
        %v1529 = vld [vmem:[%s1514 + $0x38] sm:$0xf]
        %v1530 = vld [vmem:[%s1514 + $0x3c] sm:$0xf]
        %v1547 = vunpack.c.l.b16 %v1515
        %v1548 = vunpack.c.l.b16 %v1516
        %v1549 = vunpack.c.l.b16 %v1517
        %v1550 = vunpack.c.l.b16 %v1518
        %v1551 = vunpack.c.l.b16 %v1519
        %v1552 = vunpack.c.l.b16 %v1520
        %v1553 = vunpack.c.l.b16 %v1521
        %v1554 = vunpack.c.l.b16 %v1522
        %v1555 = vunpack.c.l.b16 %v1523
        %v1556 = vunpack.c.l.b16 %v1524
        %v1557 = vunpack.c.l.b16 %v1525
        %v1558 = vunpack.c.l.b16 %v1526
        %v1559 = vunpack.c.l.b16 %v1527
        %v1560 = vunpack.c.l.b16 %v1528
        %v1561 = vunpack.c.l.b16 %v1529
        %v1562 = vunpack.c.l.b16 %v1530
        %v1563 = vpack.c.b16 %v1548, %v1547
        %v1564 = vpack.c.b16 %v1550, %v1549
        %v1565 = vpack.c.b16 %v1552, %v1551
        %v1566 = vpack.c.b16 %v1554, %v1553
        %v1567 = vpack.c.b16 %v1556, %v1555
        %v1568 = vpack.c.b16 %v1558, %v1557
        %v1569 = vpack.c.b16 %v1560, %v1559
        %v1570 = vpack.c.b16 %v1562, %v1561
        %v1576 = vunpack.c.l.b16 %v1509
        %v1577 = vunpack.c.h.b16 %v1509
        %v1578 = vunpack.c.l.b16 %v1510
        %v1579 = vunpack.c.h.b16 %v1510
        %v1580 = vunpack.c.l.b16 %v1511
        %v1581 = vunpack.c.h.b16 %v1511
        %v1582 = vunpack.c.l.b16 %v1512
        %v1583 = vunpack.c.h.b16 %v1512
        %v1584 = vunpack.c.l.b16 %v1513
        %v1585 = vunpack.c.h.b16 %v1513
        %v1586 = vpack.c.b16 %v1578, %v1576
        %v1587 = vpack.c.b16 %v1579, %v1577
        %v1588 = vpack.c.b16 %v1582, %v1580
        %v1589 = vpack.c.b16 %v1583, %v1581
        %v1590 = vpack.c.b16 %v1584, %v1584
        %v1591 = vpack.c.b16 %v1585, %v1585
        %1592 = vrot.lane.b32.xlu0 %v1586, 110
        %v1593 = vpop.permute.xlu0 %1592
        %1594 = vrot.lane.b32.xlu0 %v1587, 110
        %v1595 = vpop.permute.xlu0 %1594
        %1596 = vrot.lane.b32.xlu0 %v1588, 110
        %v1597 = vpop.permute.xlu0 %1596
        %1598 = vrot.lane.b32.xlu0 %v1589, 110
        %v1599 = vpop.permute.xlu0 %1598
        %1600 = vrot.lane.b32.xlu0 %v1590, 110
        %v1601 = vpop.permute.xlu0 %1600
        %1602 = vrot.lane.b32.xlu0 %v1591, 110
        %v1603 = vpop.permute.xlu0 %1602
        %vm1604 = vcmask 900096
        %v1605 = vsel %vm1604, %v1593, %v1595
        %v1606 = vsel %vm1604, %v1597, %v1599
        %v1607 = vsel %vm1604, %v1601, %v1603
        %v1611 = vsel %vm480, %v1563, 0
        %v1614 = vsel %vm480, %v1564, 0
        %v1617 = vsel %vm480, %v1565, 0
        %v1620 = vsel %vm480, %v1566, 0
        %v1623 = vsel %vm480, %v1567, 0
        %v1626 = vsel %vm480, %v1568, 0
        %v1629 = vsel %vm480, %v1569, 0
        %v1632 = vsel %vm480, %v1570, 0
        %v1635 = vsel %vm505, %v1607, 0
        %1637 = vmatprep.subr.bf16.mxu0 0
        %1638 = vmatpush1.bf16.msra.mxu0 %v1605
        %1639 = vmatprep.subr.bf16.mxu0 0
        %1640 = vmatpush1.bf16.msra.mxu0 %v1606
        %1641 = vmatprep.subr.bf16.mxu0 0
        %1642 = vmatpush1.bf16.msra.mxu0 %v1635
        %1643 = vmatprep.subr.bf16.mxu0 0
        %1644 = vmatpush1.bf16.msra.mxu0 0
        %1645 = vmatprep.subr.bf16.mxu0 0
        %1646 = vmatpush1.bf16.msra.mxu0 0
        %1647 = vmatprep.subr.bf16.mxu0 0
        %1648 = vmatpush1.bf16.msra.mxu0 0
        %1649 = vmatprep.subr.bf16.mxu0 0
        %1650 = vmatpush1.bf16.msra.mxu0 0
        %1651 = vmatprep.subr.bf16.mxu0 0
        %1652 = vmatpush1.bf16.msra.mxu0 0
        %1653 = vmatprep.subr.bf16.mxu0 0
        %1654 = vmatpush1.bf16.msra.mxu0 0
        %1655 = vmatprep.subr.bf16.mxu0 0
        %1656 = vmatpush1.bf16.msra.mxu0 0
        %1657 = vmatprep.subr.bf16.mxu0 0
        %1658 = vmatpush1.bf16.msra.mxu0 0
        %1659 = vmatprep.subr.bf16.mxu0 0
        %1660 = vmatpush1.bf16.msra.mxu0 0
        %1661 = vmatprep.subr.bf16.mxu0 0
        %1662 = vmatpush1.bf16.msra.mxu0 0
        %1663 = vmatprep.subr.bf16.mxu0 0
        %1664 = vmatpush1.bf16.msra.mxu0 0
        %1665 = vmatprep.subr.bf16.mxu0 0
        %1666 = vmatpush1.bf16.msra.mxu0 0
        %1667 = vmatprep.subr.bf16.mxu0 0
        %1668 = vmatpush1.bf16.msra.mxu0 0
        %1669 = vmatprep.mubr.bf16.mxu0 0
        %1670 = vmatmul.mubr.bf16.gmra.mrb[0].mxu0 %v1611
        %v1671 = vpop.f32.mrb[0].mxu0
        %v1672 = vadd.f32 0.0, %v1671
        %v1673 = vpop.f32.mrb[0].mxu0
        %v1674 = vpop.f32.mrb[0].mxu0
        %v1675 = vadd.f32 0.0, %v1674
        %v1676 = vpop.f32.mrb[0].mxu0
        %1677 = vmatprep.mubr.bf16.mxu0 0
        %1678 = vmatmul.mubr.bf16.gmra.mrb[0].mxu0 %v1614
        %v1679 = vpop.f32.mrb[0].mxu0
        %v1680 = vadd.f32 0.0, %v1679
        %v1681 = vpop.f32.mrb[0].mxu0
        %v1682 = vpop.f32.mrb[0].mxu0
        %v1683 = vadd.f32 0.0, %v1682
        %v1684 = vpop.f32.mrb[0].mxu0
        %1685 = vmatprep.mubr.bf16.mxu0 0
        %1686 = vmatmul.mubr.bf16.gmra.mrb[0].mxu0 %v1617
        %v1687 = vpop.f32.mrb[0].mxu0
        %v1688 = vadd.f32 0.0, %v1687
        %v1689 = vpop.f32.mrb[0].mxu0
        %v1690 = vpop.f32.mrb[0].mxu0
        %v1691 = vadd.f32 0.0, %v1690
        %v1692 = vpop.f32.mrb[0].mxu0
        %1693 = vmatprep.mubr.bf16.mxu0 0
        %1694 = vmatmul.mubr.bf16.gmra.mrb[0].mxu0 %v1620
        %v1695 = vpop.f32.mrb[0].mxu0
        %v1696 = vadd.f32 0.0, %v1695
        %v1697 = vpop.f32.mrb[0].mxu0
        %v1698 = vpop.f32.mrb[0].mxu0
        %v1699 = vadd.f32 0.0, %v1698
        %v1700 = vpop.f32.mrb[0].mxu0
        %1701 = vmatprep.mubr.bf16.mxu0 0
        %1702 = vmatmul.mubr.bf16.gmra.mrb[0].mxu0 %v1623
        %v1703 = vpop.f32.mrb[0].mxu0
        %v1704 = vadd.f32 0.0, %v1703
        %v1705 = vpop.f32.mrb[0].mxu0
        %v1706 = vpop.f32.mrb[0].mxu0
        %v1707 = vadd.f32 0.0, %v1706
        %v1708 = vpop.f32.mrb[0].mxu0
        %1709 = vmatprep.mubr.bf16.mxu0 0
        %1710 = vmatmul.mubr.bf16.gmra.mrb[0].mxu0 %v1626
        %v1711 = vpop.f32.mrb[0].mxu0
        %v1712 = vadd.f32 0.0, %v1711
        %v1713 = vpop.f32.mrb[0].mxu0
        %v1714 = vpop.f32.mrb[0].mxu0
        %v1715 = vadd.f32 0.0, %v1714
        %v1716 = vpop.f32.mrb[0].mxu0
        %1717 = vmatprep.mubr.bf16.mxu0 0
        %1718 = vmatmul.mubr.bf16.gmra.mrb[0].mxu0 %v1629
        %v1719 = vpop.f32.mrb[0].mxu0
        %v1720 = vadd.f32 0.0, %v1719
        %v1721 = vpop.f32.mrb[0].mxu0
        %v1722 = vpop.f32.mrb[0].mxu0
        %v1723 = vadd.f32 0.0, %v1722
        %v1724 = vpop.f32.mrb[0].mxu0
        %1725 = vmatprep.mubr.bf16.mxu0 0
        %1726 = vmatmul.mubr.bf16.gmra.mrb[0].mxu0 %v1632
        %v1727 = vpop.f32.mrb[0].mxu0
        %v1728 = vadd.f32 0.0, %v1727
        %v1729 = vpop.f32.mrb[0].mxu0
        %v1730 = vpop.f32.mrb[0].mxu0
        %v1731 = vadd.f32 0.0, %v1730
        %v1732 = vpop.f32.mrb[0].mxu0
        %1733 = vdwg.mxu0
        %v1734 = vadd.f32 %v1487, %v1672
        %v1735 = vadd.f32 %v1488, %v1675
        %v1736 = vadd.f32 %v1489, %v1680
        %v1737 = vadd.f32 %v1490, %v1683
        %v1738 = vadd.f32 %v1491, %v1688
        %v1739 = vadd.f32 %v1492, %v1691
        %v1740 = vadd.f32 %v1493, %v1696
        %v1741 = vadd.f32 %v1494, %v1699
        %v1742 = vadd.f32 %v1495, %v1704
        %v1743 = vadd.f32 %v1496, %v1707
        %v1744 = vadd.f32 %v1497, %v1712
        %v1745 = vadd.f32 %v1498, %v1715
        %v1746 = vadd.f32 %v1499, %v1720
        %v1747 = vadd.f32 %v1500, %v1723
        %v1748 = vadd.f32 %v1501, %v1728
        %v1749 = vadd.f32 %v1502, %v1731
        %1750 = vrot.lane.b32.xlu0 %v1040, 32
        %v1751 = vpop.permute.xlu0 %1750
        %v1752 = vrot.slane %v1751, 4
        %vm1753 = vcmask 261120
        %v1754 = vsel %vm1753, %v1752, %v1751
        %vm1755 = vcmp.ne.s16.totalorder %v1754, 0
        %v1756 = vsel %vm1755, %v337, 0
        %v1757 = vsel %vm1755, %v338, 0
        %v1758 = vsel %vm1755, %v339, 0
        %v1759 = vsel %vm1755, %v340, 0
        %v1760 = vsel %vm1755, %v341, 0
        %s1761 = scalar_lea.vmem %s1, 384
        %v1762 = vld [vmem:[%s1761] sm:$0xf]
        %v1763 = vld [vmem:[%s1761 + $0x4] sm:$0xf]
        %v1764 = vld [vmem:[%s1761 + $0x8] sm:$0xf]
        %v1765 = vld [vmem:[%s1761 + $0xc] sm:$0xf]
        %v1766 = vld [vmem:[%s1761 + $0x10] sm:$0xf]
        %v1767 = vld [vmem:[%s1761 + $0x14] sm:$0xf]
        %v1768 = vld [vmem:[%s1761 + $0x18] sm:$0xf]
        %v1769 = vld [vmem:[%s1761 + $0x1c] sm:$0xf]
        %v1770 = vld [vmem:[%s1761 + $0x20] sm:$0xf]
        %v1771 = vld [vmem:[%s1761 + $0x24] sm:$0xf]
        %v1772 = vld [vmem:[%s1761 + $0x28] sm:$0xf]
        %v1773 = vld [vmem:[%s1761 + $0x2c] sm:$0xf]
        %v1774 = vld [vmem:[%s1761 + $0x30] sm:$0xf]
        %v1775 = vld [vmem:[%s1761 + $0x34] sm:$0xf]
        %v1776 = vld [vmem:[%s1761 + $0x38] sm:$0xf]
        %v1777 = vld [vmem:[%s1761 + $0x3c] sm:$0xf]
        %v1794 = vunpack.c.l.b16 %v1762
        %v1795 = vunpack.c.l.b16 %v1763
        %v1796 = vunpack.c.l.b16 %v1764
        %v1797 = vunpack.c.l.b16 %v1765
        %v1798 = vunpack.c.l.b16 %v1766
        %v1799 = vunpack.c.l.b16 %v1767
        %v1800 = vunpack.c.l.b16 %v1768
        %v1801 = vunpack.c.l.b16 %v1769
        %v1802 = vunpack.c.l.b16 %v1770
        %v1803 = vunpack.c.l.b16 %v1771
        %v1804 = vunpack.c.l.b16 %v1772
        %v1805 = vunpack.c.l.b16 %v1773
        %v1806 = vunpack.c.l.b16 %v1774
        %v1807 = vunpack.c.l.b16 %v1775
        %v1808 = vunpack.c.l.b16 %v1776
        %v1809 = vunpack.c.l.b16 %v1777
        %v1810 = vpack.c.b16 %v1795, %v1794
        %v1811 = vpack.c.b16 %v1797, %v1796
        %v1812 = vpack.c.b16 %v1799, %v1798
        %v1813 = vpack.c.b16 %v1801, %v1800
        %v1814 = vpack.c.b16 %v1803, %v1802
        %v1815 = vpack.c.b16 %v1805, %v1804
        %v1816 = vpack.c.b16 %v1807, %v1806
        %v1817 = vpack.c.b16 %v1809, %v1808
        %v1823 = vunpack.c.l.b16 %v1756
        %v1824 = vunpack.c.h.b16 %v1756
        %v1825 = vunpack.c.l.b16 %v1757
        %v1826 = vunpack.c.h.b16 %v1757
        %v1827 = vunpack.c.l.b16 %v1758
        %v1828 = vunpack.c.h.b16 %v1758
        %v1829 = vunpack.c.l.b16 %v1759
        %v1830 = vunpack.c.h.b16 %v1759
        %v1831 = vunpack.c.l.b16 %v1760
        %v1832 = vunpack.c.h.b16 %v1760
        %v1833 = vpack.c.b16 %v1825, %v1823
        %v1834 = vpack.c.b16 %v1826, %v1824
        %v1835 = vpack.c.b16 %v1829, %v1827
        %v1836 = vpack.c.b16 %v1830, %v1828
        %v1837 = vpack.c.b16 %v1831, %v1831
        %v1838 = vpack.c.b16 %v1832, %v1832
        %1839 = vrot.lane.b32.xlu0 %v1833, 96
        %v1840 = vpop.permute.xlu0 %1839
        %1841 = vrot.lane.b32.xlu0 %v1834, 96
        %v1842 = vpop.permute.xlu0 %1841
        %1843 = vrot.lane.b32.xlu0 %v1835, 96
        %v1844 = vpop.permute.xlu0 %1843
        %1845 = vrot.lane.b32.xlu0 %v1836, 96
        %v1846 = vpop.permute.xlu0 %1845
        %1847 = vrot.lane.b32.xlu0 %v1837, 96
        %v1848 = vpop.permute.xlu0 %1847
        %1849 = vrot.lane.b32.xlu0 %v1838, 96
        %v1850 = vpop.permute.xlu0 %1849
        %vm1851 = vcmask 785408
        %v1852 = vsel %vm1851, %v1840, %v1842
        %v1853 = vsel %vm1851, %v1844, %v1846
        %v1854 = vsel %vm1851, %v1848, %v1850
        %v1858 = vsel %vm480, %v1810, 0
        %v1861 = vsel %vm480, %v1811, 0
        %v1864 = vsel %vm480, %v1812, 0
        %v1867 = vsel %vm480, %v1813, 0
        %v1870 = vsel %vm480, %v1814, 0
        %v1873 = vsel %vm480, %v1815, 0
        %v1876 = vsel %vm480, %v1816, 0
        %v1879 = vsel %vm480, %v1817, 0
        %v1882 = vsel %vm505, %v1854, 0
        %1884 = vmatprep.subr.bf16.mxu0 0
        %1885 = vmatpush1.bf16.msra.mxu0 %v1852
        %1886 = vmatprep.subr.bf16.mxu0 0
        %1887 = vmatpush1.bf16.msra.mxu0 %v1853
        %1888 = vmatprep.subr.bf16.mxu0 0
        %1889 = vmatpush1.bf16.msra.mxu0 %v1882
        %1890 = vmatprep.subr.bf16.mxu0 0
        %1891 = vmatpush1.bf16.msra.mxu0 0
        %1892 = vmatprep.subr.bf16.mxu0 0
        %1893 = vmatpush1.bf16.msra.mxu0 0
        %1894 = vmatprep.subr.bf16.mxu0 0
        %1895 = vmatpush1.bf16.msra.mxu0 0
        %1896 = vmatprep.subr.bf16.mxu0 0
        %1897 = vmatpush1.bf16.msra.mxu0 0
        %1898 = vmatprep.subr.bf16.mxu0 0
        %1899 = vmatpush1.bf16.msra.mxu0 0
        %1900 = vmatprep.subr.bf16.mxu0 0
        %1901 = vmatpush1.bf16.msra.mxu0 0
        %1902 = vmatprep.subr.bf16.mxu0 0
        %1903 = vmatpush1.bf16.msra.mxu0 0
        %1904 = vmatprep.subr.bf16.mxu0 0
        %1905 = vmatpush1.bf16.msra.mxu0 0
        %1906 = vmatprep.subr.bf16.mxu0 0
        %1907 = vmatpush1.bf16.msra.mxu0 0
        %1908 = vmatprep.subr.bf16.mxu0 0
        %1909 = vmatpush1.bf16.msra.mxu0 0
        %1910 = vmatprep.subr.bf16.mxu0 0
        %1911 = vmatpush1.bf16.msra.mxu0 0
        %1912 = vmatprep.subr.bf16.mxu0 0
        %1913 = vmatpush1.bf16.msra.mxu0 0
        %1914 = vmatprep.subr.bf16.mxu0 0
        %1915 = vmatpush1.bf16.msra.mxu0 0
        %1916 = vmatprep.mubr.bf16.mxu0 0
        %1917 = vmatmul.mubr.bf16.gmra.mrb[0].mxu0 %v1858
        %v1918 = vpop.f32.mrb[0].mxu0
        %v1919 = vadd.f32 0.0, %v1918
        %v1920 = vpop.f32.mrb[0].mxu0
        %v1921 = vpop.f32.mrb[0].mxu0
        %v1922 = vadd.f32 0.0, %v1921
        %v1923 = vpop.f32.mrb[0].mxu0
        %1924 = vmatprep.mubr.bf16.mxu0 0
        %1925 = vmatmul.mubr.bf16.gmra.mrb[0].mxu0 %v1861
        %v1926 = vpop.f32.mrb[0].mxu0
        %v1927 = vadd.f32 0.0, %v1926
        %v1928 = vpop.f32.mrb[0].mxu0
        %v1929 = vpop.f32.mrb[0].mxu0
        %v1930 = vadd.f32 0.0, %v1929
        %v1931 = vpop.f32.mrb[0].mxu0
        %1932 = vmatprep.mubr.bf16.mxu0 0
        %1933 = vmatmul.mubr.bf16.gmra.mrb[0].mxu0 %v1864
        %v1934 = vpop.f32.mrb[0].mxu0
        %v1935 = vadd.f32 0.0, %v1934
        %v1936 = vpop.f32.mrb[0].mxu0
        %v1937 = vpop.f32.mrb[0].mxu0
        %v1938 = vadd.f32 0.0, %v1937
        %v1939 = vpop.f32.mrb[0].mxu0
        %1940 = vmatprep.mubr.bf16.mxu0 0
        %1941 = vmatmul.mubr.bf16.gmra.mrb[0].mxu0 %v1867
        %v1942 = vpop.f32.mrb[0].mxu0
        %v1943 = vadd.f32 0.0, %v1942
        %v1944 = vpop.f32.mrb[0].mxu0
        %v1945 = vpop.f32.mrb[0].mxu0
        %v1946 = vadd.f32 0.0, %v1945
        %v1947 = vpop.f32.mrb[0].mxu0
        %1948 = vmatprep.mubr.bf16.mxu0 0
        %1949 = vmatmul.mubr.bf16.gmra.mrb[0].mxu0 %v1870
        %v1950 = vpop.f32.mrb[0].mxu0
        %v1951 = vadd.f32 0.0, %v1950
        %v1952 = vpop.f32.mrb[0].mxu0
        %v1953 = vpop.f32.mrb[0].mxu0
        %v1954 = vadd.f32 0.0, %v1953
        %v1955 = vpop.f32.mrb[0].mxu0
        %1956 = vmatprep.mubr.bf16.mxu0 0
        %1957 = vmatmul.mubr.bf16.gmra.mrb[0].mxu0 %v1873
        %v1958 = vpop.f32.mrb[0].mxu0
        %v1959 = vadd.f32 0.0, %v1958
        %v1960 = vpop.f32.mrb[0].mxu0
        %v1961 = vpop.f32.mrb[0].mxu0
        %v1962 = vadd.f32 0.0, %v1961
        %v1963 = vpop.f32.mrb[0].mxu0
        %1964 = vmatprep.mubr.bf16.mxu0 0
        %1965 = vmatmul.mubr.bf16.gmra.mrb[0].mxu0 %v1876
        %v1966 = vpop.f32.mrb[0].mxu0
        %v1967 = vadd.f32 0.0, %v1966
        %v1968 = vpop.f32.mrb[0].mxu0
        %v1969 = vpop.f32.mrb[0].mxu0
        %v1970 = vadd.f32 0.0, %v1969
        %v1971 = vpop.f32.mrb[0].mxu0
        %1972 = vmatprep.mubr.bf16.mxu0 0
        %1973 = vmatmul.mubr.bf16.gmra.mrb[0].mxu0 %v1879
        %v1974 = vpop.f32.mrb[0].mxu0
        %v1975 = vadd.f32 0.0, %v1974
        %v1976 = vpop.f32.mrb[0].mxu0
        %v1977 = vpop.f32.mrb[0].mxu0
        %v1978 = vadd.f32 0.0, %v1977
        %v1979 = vpop.f32.mrb[0].mxu0
        %1980 = vdwg.mxu0
        %v1981 = vadd.f32 %v1734, %v1919
        %v1982 = vadd.f32 %v1735, %v1922
        %v1983 = vadd.f32 %v1736, %v1927
        %v1984 = vadd.f32 %v1737, %v1930
        %v1985 = vadd.f32 %v1738, %v1935
        %v1986 = vadd.f32 %v1739, %v1938
        %v1987 = vadd.f32 %v1740, %v1943
        %v1988 = vadd.f32 %v1741, %v1946
        %v1989 = vadd.f32 %v1742, %v1951
        %v1990 = vadd.f32 %v1743, %v1954
        %v1991 = vadd.f32 %v1744, %v1959
        %v1992 = vadd.f32 %v1745, %v1962
        %v1993 = vadd.f32 %v1746, %v1967
        %v1994 = vadd.f32 %v1747, %v1970
        %v1995 = vadd.f32 %v1748, %v1975
        %v1996 = vadd.f32 %v1749, %v1978
        %s1997 = scalar_lea.vmem %s1, 448
        %v1998 = vld [vmem:[%s1997] sm:$0xf]
        %v1999 = vld [vmem:[%s1997 + $0x4] sm:$0xf]
        %v2000 = vld [vmem:[%s1997 + $0x8] sm:$0xf]
        %v2001 = vld [vmem:[%s1997 + $0xc] sm:$0xf]
        %v2002 = vld [vmem:[%s1997 + $0x10] sm:$0xf]
        %v2003 = vld [vmem:[%s1997 + $0x14] sm:$0xf]
        %v2004 = vld [vmem:[%s1997 + $0x18] sm:$0xf]
        %v2005 = vld [vmem:[%s1997 + $0x1c] sm:$0xf]
        %v2006 = vld [vmem:[%s1997 + $0x20] sm:$0xf]
        %v2007 = vld [vmem:[%s1997 + $0x24] sm:$0xf]
        %v2008 = vld [vmem:[%s1997 + $0x28] sm:$0xf]
        %v2009 = vld [vmem:[%s1997 + $0x2c] sm:$0xf]
        %v2010 = vld [vmem:[%s1997 + $0x30] sm:$0xf]
        %v2011 = vld [vmem:[%s1997 + $0x34] sm:$0xf]
        %v2012 = vld [vmem:[%s1997 + $0x38] sm:$0xf]
        %v2013 = vld [vmem:[%s1997 + $0x3c] sm:$0xf]
        %v2030 = vunpack.c.l.b16 %v1998
        %v2031 = vunpack.c.l.b16 %v1999
        %v2032 = vunpack.c.l.b16 %v2000
        %v2033 = vunpack.c.l.b16 %v2001
        %v2034 = vunpack.c.l.b16 %v2002
        %v2035 = vunpack.c.l.b16 %v2003
        %v2036 = vunpack.c.l.b16 %v2004
        %v2037 = vunpack.c.l.b16 %v2005
        %v2038 = vunpack.c.l.b16 %v2006
        %v2039 = vunpack.c.l.b16 %v2007
        %v2040 = vunpack.c.l.b16 %v2008
        %v2041 = vunpack.c.l.b16 %v2009
        %v2042 = vunpack.c.l.b16 %v2010
        %v2043 = vunpack.c.l.b16 %v2011
        %v2044 = vunpack.c.l.b16 %v2012
        %v2045 = vunpack.c.l.b16 %v2013
        %v2046 = vpack.c.b16 %v2031, %v2030
        %v2047 = vpack.c.b16 %v2033, %v2032
        %v2048 = vpack.c.b16 %v2035, %v2034
        %v2049 = vpack.c.b16 %v2037, %v2036
        %v2050 = vpack.c.b16 %v2039, %v2038
        %v2051 = vpack.c.b16 %v2041, %v2040
        %v2052 = vpack.c.b16 %v2043, %v2042
        %v2053 = vpack.c.b16 %v2045, %v2044
        %2054 = vrot.lane.b32.xlu0 %v456, 95
        %v2055 = vpop.permute.xlu0 %2054
        %2056 = vrot.lane.b32.xlu0 %v457, 95
        %v2057 = vpop.permute.xlu0 %2056
        %2058 = vrot.lane.b32.xlu0 %v458, 95
        %v2059 = vpop.permute.xlu0 %2058
        %2060 = vrot.lane.b32.xlu0 %v459, 95
        %v2061 = vpop.permute.xlu0 %2060
        %2062 = vrot.lane.b32.xlu0 %v460, 95
        %v2063 = vpop.permute.xlu0 %2062
        %2064 = vrot.lane.b32.xlu0 %v461, 95
        %v2065 = vpop.permute.xlu0 %2064
        %vm2066 = vcmask 777216
        %v2067 = vsel %vm2066, %v2055, %v2057
        %v2068 = vsel %vm2066, %v2059, %v2061
        %v2069 = vsel %vm2066, %v2063, %v2065
        %v2073 = vsel %vm480, %v2046, 0
        %v2076 = vsel %vm480, %v2047, 0
        %v2079 = vsel %vm480, %v2048, 0
        %v2082 = vsel %vm480, %v2049, 0
        %v2085 = vsel %vm480, %v2050, 0
        %v2088 = vsel %vm480, %v2051, 0
        %v2091 = vsel %vm480, %v2052, 0
        %v2094 = vsel %vm480, %v2053, 0
        %v2097 = vsel %vm505, %v2069, 0
        %2099 = vmatprep.subr.bf16.mxu0 0
        %2100 = vmatpush1.bf16.msra.mxu0 %v2067
        %2101 = vmatprep.subr.bf16.mxu0 0
        %2102 = vmatpush1.bf16.msra.mxu0 %v2068
        %2103 = vmatprep.subr.bf16.mxu0 0
        %2104 = vmatpush1.bf16.msra.mxu0 %v2097
        %2105 = vmatprep.subr.bf16.mxu0 0
        %2106 = vmatpush1.bf16.msra.mxu0 0
        %2107 = vmatprep.subr.bf16.mxu0 0
        %2108 = vmatpush1.bf16.msra.mxu0 0
        %2109 = vmatprep.subr.bf16.mxu0 0
        %2110 = vmatpush1.bf16.msra.mxu0 0
        %2111 = vmatprep.subr.bf16.mxu0 0
        %2112 = vmatpush1.bf16.msra.mxu0 0
        %2113 = vmatprep.subr.bf16.mxu0 0
        %2114 = vmatpush1.bf16.msra.mxu0 0
        %2115 = vmatprep.subr.bf16.mxu0 0
        %2116 = vmatpush1.bf16.msra.mxu0 0
        %2117 = vmatprep.subr.bf16.mxu0 0
        %2118 = vmatpush1.bf16.msra.mxu0 0
        %2119 = vmatprep.subr.bf16.mxu0 0
        %2120 = vmatpush1.bf16.msra.mxu0 0
        %2121 = vmatprep.subr.bf16.mxu0 0
        %2122 = vmatpush1.bf16.msra.mxu0 0
        %2123 = vmatprep.subr.bf16.mxu0 0
        %2124 = vmatpush1.bf16.msra.mxu0 0
        %2125 = vmatprep.subr.bf16.mxu0 0
        %2126 = vmatpush1.bf16.msra.mxu0 0
        %2127 = vmatprep.subr.bf16.mxu0 0
        %2128 = vmatpush1.bf16.msra.mxu0 0
        %2129 = vmatprep.subr.bf16.mxu0 0
        %2130 = vmatpush1.bf16.msra.mxu0 0
        %2131 = vmatprep.mubr.bf16.mxu0 0
        %2132 = vmatmul.mubr.bf16.gmra.mrb[0].mxu0 %v2073
        %v2133 = vpop.f32.mrb[0].mxu0
        %v2134 = vadd.f32 0.0, %v2133
        %v2135 = vpop.f32.mrb[0].mxu0
        %v2136 = vpop.f32.mrb[0].mxu0
        %v2137 = vadd.f32 0.0, %v2136
        %v2138 = vpop.f32.mrb[0].mxu0
        %2139 = vmatprep.mubr.bf16.mxu0 0
        %2140 = vmatmul.mubr.bf16.gmra.mrb[0].mxu0 %v2076
        %v2141 = vpop.f32.mrb[0].mxu0
        %v2142 = vadd.f32 0.0, %v2141
        %v2143 = vpop.f32.mrb[0].mxu0
        %v2144 = vpop.f32.mrb[0].mxu0
        %v2145 = vadd.f32 0.0, %v2144
        %v2146 = vpop.f32.mrb[0].mxu0
        %2147 = vmatprep.mubr.bf16.mxu0 0
        %2148 = vmatmul.mubr.bf16.gmra.mrb[0].mxu0 %v2079
        %v2149 = vpop.f32.mrb[0].mxu0
        %v2150 = vadd.f32 0.0, %v2149
        %v2151 = vpop.f32.mrb[0].mxu0
        %v2152 = vpop.f32.mrb[0].mxu0
        %v2153 = vadd.f32 0.0, %v2152
        %v2154 = vpop.f32.mrb[0].mxu0
        %2155 = vmatprep.mubr.bf16.mxu0 0
        %2156 = vmatmul.mubr.bf16.gmra.mrb[0].mxu0 %v2082
        %v2157 = vpop.f32.mrb[0].mxu0
        %v2158 = vadd.f32 0.0, %v2157
        %v2159 = vpop.f32.mrb[0].mxu0
        %v2160 = vpop.f32.mrb[0].mxu0
        %v2161 = vadd.f32 0.0, %v2160
        %v2162 = vpop.f32.mrb[0].mxu0
        %2163 = vmatprep.mubr.bf16.mxu0 0
        %2164 = vmatmul.mubr.bf16.gmra.mrb[0].mxu0 %v2085
        %v2165 = vpop.f32.mrb[0].mxu0
        %v2166 = vadd.f32 0.0, %v2165
        %v2167 = vpop.f32.mrb[0].mxu0
        %v2168 = vpop.f32.mrb[0].mxu0
        %v2169 = vadd.f32 0.0, %v2168
        %v2170 = vpop.f32.mrb[0].mxu0
        %2171 = vmatprep.mubr.bf16.mxu0 0
        %2172 = vmatmul.mubr.bf16.gmra.mrb[0].mxu0 %v2088
        %v2173 = vpop.f32.mrb[0].mxu0
        %v2174 = vadd.f32 0.0, %v2173
        %v2175 = vpop.f32.mrb[0].mxu0
        %v2176 = vpop.f32.mrb[0].mxu0
        %v2177 = vadd.f32 0.0, %v2176
        %v2178 = vpop.f32.mrb[0].mxu0
        %2179 = vmatprep.mubr.bf16.mxu0 0
        %2180 = vmatmul.mubr.bf16.gmra.mrb[0].mxu0 %v2091
        %v2181 = vpop.f32.mrb[0].mxu0
        %v2182 = vadd.f32 0.0, %v2181
        %v2183 = vpop.f32.mrb[0].mxu0
        %v2184 = vpop.f32.mrb[0].mxu0
        %v2185 = vadd.f32 0.0, %v2184
        %v2186 = vpop.f32.mrb[0].mxu0
        %2187 = vmatprep.mubr.bf16.mxu0 0
        %2188 = vmatmul.mubr.bf16.gmra.mrb[0].mxu0 %v2094
        %v2189 = vpop.f32.mrb[0].mxu0
        %v2190 = vadd.f32 0.0, %v2189
        %v2191 = vpop.f32.mrb[0].mxu0
        %v2192 = vpop.f32.mrb[0].mxu0
        %v2193 = vadd.f32 0.0, %v2192
        %v2194 = vpop.f32.mrb[0].mxu0
        %2195 = vdwg.mxu0
        %v2196 = vadd.f32 %v1981, %v2134
        %v2197 = vadd.f32 %v1982, %v2137
        %v2198 = vadd.f32 %v1983, %v2142
        %v2199 = vadd.f32 %v1984, %v2145
        %v2200 = vadd.f32 %v1985, %v2150
        %v2201 = vadd.f32 %v1986, %v2153
        %v2202 = vadd.f32 %v1987, %v2158
        %v2203 = vadd.f32 %v1988, %v2161
        %v2204 = vadd.f32 %v1989, %v2166
        %v2205 = vadd.f32 %v1990, %v2169
        %v2206 = vadd.f32 %v1991, %v2174
        %v2207 = vadd.f32 %v1992, %v2177
        %v2208 = vadd.f32 %v1993, %v2182
        %v2209 = vadd.f32 %v1994, %v2185
        %v2210 = vadd.f32 %v1995, %v2190
        %v2211 = vadd.f32 %v1996, %v2193
        %2212 = vrot.lane.b32.xlu0 %v792, 34
        %v2213 = vpop.permute.xlu0 %2212
        %v2214 = vrot.slane %v2213, 4
        %vm2215 = vcmask 277504
        %v2216 = vsel %vm2215, %v2214, %v2213
        %vm2217 = vcmp.ne.s16.totalorder %v2216, 0
        %v2218 = vsel %vm2217, %v337, 0
        %v2219 = vsel %vm2217, %v338, 0
        %v2220 = vsel %vm2217, %v339, 0
        %v2221 = vsel %vm2217, %v340, 0
        %v2222 = vsel %vm2217, %v341, 0
        %s2223 = scalar_lea.vmem %s1, 512
        %v2224 = vld [vmem:[%s2223] sm:$0xf]
        %v2225 = vld [vmem:[%s2223 + $0x4] sm:$0xf]
        %v2226 = vld [vmem:[%s2223 + $0x8] sm:$0xf]
        %v2227 = vld [vmem:[%s2223 + $0xc] sm:$0xf]
        %v2228 = vld [vmem:[%s2223 + $0x10] sm:$0xf]
        %v2229 = vld [vmem:[%s2223 + $0x14] sm:$0xf]
        %v2230 = vld [vmem:[%s2223 + $0x18] sm:$0xf]
        %v2231 = vld [vmem:[%s2223 + $0x1c] sm:$0xf]
        %v2232 = vld [vmem:[%s2223 + $0x20] sm:$0xf]
        %v2233 = vld [vmem:[%s2223 + $0x24] sm:$0xf]
        %v2234 = vld [vmem:[%s2223 + $0x28] sm:$0xf]
        %v2235 = vld [vmem:[%s2223 + $0x2c] sm:$0xf]
        %v2236 = vld [vmem:[%s2223 + $0x30] sm:$0xf]
        %v2237 = vld [vmem:[%s2223 + $0x34] sm:$0xf]
        %v2238 = vld [vmem:[%s2223 + $0x38] sm:$0xf]
        %v2239 = vld [vmem:[%s2223 + $0x3c] sm:$0xf]
        %v2256 = vunpack.c.l.b16 %v2224
        %v2257 = vunpack.c.l.b16 %v2225
        %v2258 = vunpack.c.l.b16 %v2226
        %v2259 = vunpack.c.l.b16 %v2227
        %v2260 = vunpack.c.l.b16 %v2228
        %v2261 = vunpack.c.l.b16 %v2229
        %v2262 = vunpack.c.l.b16 %v2230
        %v2263 = vunpack.c.l.b16 %v2231
        %v2264 = vunpack.c.l.b16 %v2232
        %v2265 = vunpack.c.l.b16 %v2233
        %v2266 = vunpack.c.l.b16 %v2234
        %v2267 = vunpack.c.l.b16 %v2235
        %v2268 = vunpack.c.l.b16 %v2236
        %v2269 = vunpack.c.l.b16 %v2237
        %v2270 = vunpack.c.l.b16 %v2238
        %v2271 = vunpack.c.l.b16 %v2239
        %v2272 = vpack.c.b16 %v2257, %v2256
        %v2273 = vpack.c.b16 %v2259, %v2258
        %v2274 = vpack.c.b16 %v2261, %v2260
        %v2275 = vpack.c.b16 %v2263, %v2262
        %v2276 = vpack.c.b16 %v2265, %v2264
        %v2277 = vpack.c.b16 %v2267, %v2266
        %v2278 = vpack.c.b16 %v2269, %v2268
        %v2279 = vpack.c.b16 %v2271, %v2270
        %v2285 = vunpack.c.l.b16 %v2218
        %v2286 = vunpack.c.h.b16 %v2218
        %v2287 = vunpack.c.l.b16 %v2219
        %v2288 = vunpack.c.h.b16 %v2219
        %v2289 = vunpack.c.l.b16 %v2220
        %v2290 = vunpack.c.h.b16 %v2220
        %v2291 = vunpack.c.l.b16 %v2221
        %v2292 = vunpack.c.h.b16 %v2221
        %v2293 = vunpack.c.l.b16 %v2222
        %v2294 = vunpack.c.h.b16 %v2222
        %v2295 = vpack.c.b16 %v2287, %v2285
        %v2296 = vpack.c.b16 %v2288, %v2286
        %v2297 = vpack.c.b16 %v2291, %v2289
        %v2298 = vpack.c.b16 %v2292, %v2290
        %v2299 = vpack.c.b16 %v2293, %v2293
        %v2300 = vpack.c.b16 %v2294, %v2294
        %2301 = vrot.lane.b32.xlu0 %v2295, 94
        %v2302 = vpop.permute.xlu0 %2301
        %2303 = vrot.lane.b32.xlu0 %v2296, 94
        %v2304 = vpop.permute.xlu0 %2303
        %2305 = vrot.lane.b32.xlu0 %v2297, 94
        %v2306 = vpop.permute.xlu0 %2305
        %2307 = vrot.lane.b32.xlu0 %v2298, 94
        %v2308 = vpop.permute.xlu0 %2307
        %2309 = vrot.lane.b32.xlu0 %v2299, 94
        %v2310 = vpop.permute.xlu0 %2309
        %2311 = vrot.lane.b32.xlu0 %v2300, 94
        %v2312 = vpop.permute.xlu0 %2311
        %vm2313 = vcmask 769024
        %v2314 = vsel %vm2313, %v2302, %v2304
        %v2315 = vsel %vm2313, %v2306, %v2308
        %v2316 = vsel %vm2313, %v2310, %v2312
        %v2320 = vsel %vm480, %v2272, 0
        %v2323 = vsel %vm480, %v2273, 0
        %v2326 = vsel %vm480, %v2274, 0
        %v2329 = vsel %vm480, %v2275, 0
        %v2332 = vsel %vm480, %v2276, 0
        %v2335 = vsel %vm480, %v2277, 0
        %v2338 = vsel %vm480, %v2278, 0
        %v2341 = vsel %vm480, %v2279, 0
        %v2344 = vsel %vm505, %v2316, 0
        %2346 = vmatprep.subr.bf16.mxu0 0
        %2347 = vmatpush1.bf16.msra.mxu0 %v2314
        %2348 = vmatprep.subr.bf16.mxu0 0
        %2349 = vmatpush1.bf16.msra.mxu0 %v2315
        %2350 = vmatprep.subr.bf16.mxu0 0
        %2351 = vmatpush1.bf16.msra.mxu0 %v2344
        %2352 = vmatprep.subr.bf16.mxu0 0
        %2353 = vmatpush1.bf16.msra.mxu0 0
        %2354 = vmatprep.subr.bf16.mxu0 0
        %2355 = vmatpush1.bf16.msra.mxu0 0
        %2356 = vmatprep.subr.bf16.mxu0 0
        %2357 = vmatpush1.bf16.msra.mxu0 0
        %2358 = vmatprep.subr.bf16.mxu0 0
        %2359 = vmatpush1.bf16.msra.mxu0 0
        %2360 = vmatprep.subr.bf16.mxu0 0
        %2361 = vmatpush1.bf16.msra.mxu0 0
        %2362 = vmatprep.subr.bf16.mxu0 0
        %2363 = vmatpush1.bf16.msra.mxu0 0
        %2364 = vmatprep.subr.bf16.mxu0 0
        %2365 = vmatpush1.bf16.msra.mxu0 0
        %2366 = vmatprep.subr.bf16.mxu0 0
        %2367 = vmatpush1.bf16.msra.mxu0 0
        %2368 = vmatprep.subr.bf16.mxu0 0
        %2369 = vmatpush1.bf16.msra.mxu0 0
        %2370 = vmatprep.subr.bf16.mxu0 0
        %2371 = vmatpush1.bf16.msra.mxu0 0
        %2372 = vmatprep.subr.bf16.mxu0 0
        %2373 = vmatpush1.bf16.msra.mxu0 0
        %2374 = vmatprep.subr.bf16.mxu0 0
        %2375 = vmatpush1.bf16.msra.mxu0 0
        %2376 = vmatprep.subr.bf16.mxu0 0
        %2377 = vmatpush1.bf16.msra.mxu0 0
        %2378 = vmatprep.mubr.bf16.mxu0 0
        %2379 = vmatmul.mubr.bf16.gmra.mrb[0].mxu0 %v2320
        %v2380 = vpop.f32.mrb[0].mxu0
        %v2381 = vadd.f32 0.0, %v2380
        %v2382 = vpop.f32.mrb[0].mxu0
        %v2383 = vpop.f32.mrb[0].mxu0
        %v2384 = vadd.f32 0.0, %v2383
        %v2385 = vpop.f32.mrb[0].mxu0
        %2386 = vmatprep.mubr.bf16.mxu0 0
        %2387 = vmatmul.mubr.bf16.gmra.mrb[0].mxu0 %v2323
        %v2388 = vpop.f32.mrb[0].mxu0
        %v2389 = vadd.f32 0.0, %v2388
        %v2390 = vpop.f32.mrb[0].mxu0
        %v2391 = vpop.f32.mrb[0].mxu0
        %v2392 = vadd.f32 0.0, %v2391
        %v2393 = vpop.f32.mrb[0].mxu0
        %2394 = vmatprep.mubr.bf16.mxu0 0
        %2395 = vmatmul.mubr.bf16.gmra.mrb[0].mxu0 %v2326
        %v2396 = vpop.f32.mrb[0].mxu0
        %v2397 = vadd.f32 0.0, %v2396
        %v2398 = vpop.f32.mrb[0].mxu0
        %v2399 = vpop.f32.mrb[0].mxu0
        %v2400 = vadd.f32 0.0, %v2399
        %v2401 = vpop.f32.mrb[0].mxu0
        %2402 = vmatprep.mubr.bf16.mxu0 0
        %2403 = vmatmul.mubr.bf16.gmra.mrb[0].mxu0 %v2329
        %v2404 = vpop.f32.mrb[0].mxu0
        %v2405 = vadd.f32 0.0, %v2404
        %v2406 = vpop.f32.mrb[0].mxu0
        %v2407 = vpop.f32.mrb[0].mxu0
        %v2408 = vadd.f32 0.0, %v2407
        %v2409 = vpop.f32.mrb[0].mxu0
        %2410 = vmatprep.mubr.bf16.mxu0 0
        %2411 = vmatmul.mubr.bf16.gmra.mrb[0].mxu0 %v2332
        %v2412 = vpop.f32.mrb[0].mxu0
        %v2413 = vadd.f32 0.0, %v2412
        %v2414 = vpop.f32.mrb[0].mxu0
        %v2415 = vpop.f32.mrb[0].mxu0
        %v2416 = vadd.f32 0.0, %v2415
        %v2417 = vpop.f32.mrb[0].mxu0
        %2418 = vmatprep.mubr.bf16.mxu0 0
        %2419 = vmatmul.mubr.bf16.gmra.mrb[0].mxu0 %v2335
        %v2420 = vpop.f32.mrb[0].mxu0
        %v2421 = vadd.f32 0.0, %v2420
        %v2422 = vpop.f32.mrb[0].mxu0
        %v2423 = vpop.f32.mrb[0].mxu0
        %v2424 = vadd.f32 0.0, %v2423
        %v2425 = vpop.f32.mrb[0].mxu0
        %2426 = vmatprep.mubr.bf16.mxu0 0
        %2427 = vmatmul.mubr.bf16.gmra.mrb[0].mxu0 %v2338
        %v2428 = vpop.f32.mrb[0].mxu0
        %v2429 = vadd.f32 0.0, %v2428
        %v2430 = vpop.f32.mrb[0].mxu0
        %v2431 = vpop.f32.mrb[0].mxu0
        %v2432 = vadd.f32 0.0, %v2431
        %v2433 = vpop.f32.mrb[0].mxu0
        %2434 = vmatprep.mubr.bf16.mxu0 0
        %2435 = vmatmul.mubr.bf16.gmra.mrb[0].mxu0 %v2341
        %v2436 = vpop.f32.mrb[0].mxu0
        %v2437 = vadd.f32 0.0, %v2436
        %v2438 = vpop.f32.mrb[0].mxu0
        %v2439 = vpop.f32.mrb[0].mxu0
        %v2440 = vadd.f32 0.0, %v2439
        %v2441 = vpop.f32.mrb[0].mxu0
        %2442 = vdwg.mxu0
        %v2443 = vadd.f32 %v2196, %v2381
        %v2444 = vadd.f32 %v2197, %v2384
        %v2445 = vadd.f32 %v2198, %v2389
        %v2446 = vadd.f32 %v2199, %v2392
        %v2447 = vadd.f32 %v2200, %v2397
        %v2448 = vadd.f32 %v2201, %v2400
        %v2449 = vadd.f32 %v2202, %v2405
        %v2450 = vadd.f32 %v2203, %v2408
        %v2451 = vadd.f32 %v2204, %v2413
        %v2452 = vadd.f32 %v2205, %v2416
        %v2453 = vadd.f32 %v2206, %v2421
        %v2454 = vadd.f32 %v2207, %v2424
        %v2455 = vadd.f32 %v2208, %v2429
        %v2456 = vadd.f32 %v2209, %v2432
        %v2457 = vadd.f32 %v2210, %v2437
        %v2458 = vadd.f32 %v2211, %v2440
        %v2459 = vld [vmem:[%s2] sm:$0xff]
        %v2460 = vld [vmem:[%s2 + $0x8] sm:$0xff]
        %v2461 = vld [vmem:[%s2 + $0x10] sm:$0xff]
        %v2462 = vld [vmem:[%s2 + $0x18] sm:$0xff]
        %v2463 = vld [vmem:[%s2 + $0x20] sm:$0xff]
        %v2464 = vld [vmem:[%s2 + $0x28] sm:$0xff]
        %v2465 = vld [vmem:[%s2 + $0x30] sm:$0xff]
        %v2466 = vld [vmem:[%s2 + $0x38] sm:$0xff]
        %v2467 = vld [vmem:[%s2 + $0x40] sm:$0xff]
        %v2468 = vld [vmem:[%s2 + $0x48] sm:$0xff]
        %v2469 = vld [vmem:[%s2 + $0x50] sm:$0xff]
        %v2470 = vld [vmem:[%s2 + $0x58] sm:$0xff]
        %v2471 = vld [vmem:[%s2 + $0x60] sm:$0xff]
        %v2472 = vld [vmem:[%s2 + $0x68] sm:$0xff]
        %v2473 = vld [vmem:[%s2 + $0x70] sm:$0xff]
        %v2474 = vld [vmem:[%s2 + $0x78] sm:$0xff]
        %2476 = vset.pattern.permute.xlu0 0
        %2477 = vperm.xlu0 %2476, %v2459
        %v2478 = vpop.permute.xlu0 %2477
        %2481 = vset.pattern.permute.xlu0 0
        %2482 = vperm.xlu0 %2481, %v2460
        %v2483 = vpop.permute.xlu0 %2482
        %2486 = vset.pattern.permute.xlu0 0
        %2487 = vperm.xlu0 %2486, %v2461
        %v2488 = vpop.permute.xlu0 %2487
        %2491 = vset.pattern.permute.xlu0 0
        %2492 = vperm.xlu0 %2491, %v2462
        %v2493 = vpop.permute.xlu0 %2492
        %2496 = vset.pattern.permute.xlu0 0
        %2497 = vperm.xlu0 %2496, %v2463
        %v2498 = vpop.permute.xlu0 %2497
        %2501 = vset.pattern.permute.xlu0 0
        %2502 = vperm.xlu0 %2501, %v2464
        %v2503 = vpop.permute.xlu0 %2502
        %2506 = vset.pattern.permute.xlu0 0
        %2507 = vperm.xlu0 %2506, %v2465
        %v2508 = vpop.permute.xlu0 %2507
        %2511 = vset.pattern.permute.xlu0 0
        %2512 = vperm.xlu0 %2511, %v2466
        %v2513 = vpop.permute.xlu0 %2512
        %2516 = vset.pattern.permute.xlu0 0
        %2517 = vperm.xlu0 %2516, %v2467
        %v2518 = vpop.permute.xlu0 %2517
        %2521 = vset.pattern.permute.xlu0 0
        %2522 = vperm.xlu0 %2521, %v2468
        %v2523 = vpop.permute.xlu0 %2522
        %2526 = vset.pattern.permute.xlu0 0
        %2527 = vperm.xlu0 %2526, %v2469
        %v2528 = vpop.permute.xlu0 %2527
        %2531 = vset.pattern.permute.xlu0 0
        %2532 = vperm.xlu0 %2531, %v2470
        %v2533 = vpop.permute.xlu0 %2532
        %2536 = vset.pattern.permute.xlu0 0
        %2537 = vperm.xlu0 %2536, %v2471
        %v2538 = vpop.permute.xlu0 %2537
        %2541 = vset.pattern.permute.xlu0 0
        %2542 = vperm.xlu0 %2541, %v2472
        %v2543 = vpop.permute.xlu0 %2542
        %2546 = vset.pattern.permute.xlu0 0
        %2547 = vperm.xlu0 %2546, %v2473
        %v2548 = vpop.permute.xlu0 %2547
        %2551 = vset.pattern.permute.xlu0 0
        %2552 = vperm.xlu0 %2551, %v2474
        %v2553 = vpop.permute.xlu0 %2552
        %v2555 = vadd.f32 %v2443, %v2478
        %v2556 = vadd.f32 %v2444, %v2483
        %v2557 = vadd.f32 %v2445, %v2488
        %v2558 = vadd.f32 %v2446, %v2493
        %v2559 = vadd.f32 %v2447, %v2498
        %v2560 = vadd.f32 %v2448, %v2503
        %v2561 = vadd.f32 %v2449, %v2508
        %v2562 = vadd.f32 %v2450, %v2513
        %v2563 = vadd.f32 %v2451, %v2518
        %v2564 = vadd.f32 %v2452, %v2523
        %v2565 = vadd.f32 %v2453, %v2528
        %v2566 = vadd.f32 %v2454, %v2533
        %v2567 = vadd.f32 %v2455, %v2538
        %v2568 = vadd.f32 %v2456, %v2543
        %v2569 = vadd.f32 %v2457, %v2548
        %v2570 = vadd.f32 %v2458, %v2553
        %v2571 = vmul.f32 %v2555, 0.5
        %v2572 = vmul.f32 %v2556, 0.5
        %v2573 = vmul.f32 %v2557, 0.5
        %v2574 = vmul.f32 %v2558, 0.5
        %v2575 = vtanh.pop %v2571
        %v2576 = vtanh.pop %v2572
        %v2577 = vtanh.pop %v2573
        %v2578 = vtanh.pop %v2574
        %v2579 = vmul.f32 %v2575, 0.5
        %v2580 = vmul.f32 %v2576, 0.5
        %v2581 = vmul.f32 %v2577, 0.5
        %v2582 = vmul.f32 %v2578, 0.5
        %v2583 = vadd.f32 %v2579, 0.5
        %v2584 = vadd.f32 %v2580, 0.5
        %v2585 = vadd.f32 %v2581, 0.5
        %v2586 = vadd.f32 %v2582, 0.5
        %v2587 = vmul.f32 %v2559, 0.5
        %v2588 = vmul.f32 %v2560, 0.5
        %v2589 = vmul.f32 %v2561, 0.5
        %v2590 = vmul.f32 %v2562, 0.5
        %v2591 = vtanh.pop %v2587
        %v2592 = vtanh.pop %v2588
        %v2593 = vtanh.pop %v2589
        %v2594 = vtanh.pop %v2590
        %v2595 = vmul.f32 %v2591, 0.5
        %v2596 = vmul.f32 %v2592, 0.5
        %v2597 = vmul.f32 %v2593, 0.5
        %v2598 = vmul.f32 %v2594, 0.5
        %v2599 = vadd.f32 %v2595, 0.5
        %v2600 = vadd.f32 %v2596, 0.5
        %v2601 = vadd.f32 %v2597, 0.5
        %v2602 = vadd.f32 %v2598, 0.5
        %v2603 = vmul.f32 %v2563, 0.5
        %v2604 = vmul.f32 %v2564, 0.5
        %v2605 = vmul.f32 %v2565, 0.5
        %v2606 = vmul.f32 %v2566, 0.5
        %v2607 = vtanh.pop %v2603
        %v2608 = vtanh.pop %v2604
        %v2609 = vtanh.pop %v2605
        %v2610 = vtanh.pop %v2606
        %v2611 = vmul.f32 %v2607, 0.5
        %v2612 = vmul.f32 %v2608, 0.5
        %v2613 = vmul.f32 %v2609, 0.5
        %v2614 = vmul.f32 %v2610, 0.5
        %v2615 = vadd.f32 %v2611, 0.5
        %v2616 = vadd.f32 %v2612, 0.5
        %v2617 = vadd.f32 %v2613, 0.5
        %v2618 = vadd.f32 %v2614, 0.5
        %v2619 = vtanh.pop %v2567
        %v2620 = vtanh.pop %v2568
        %v2621 = vtanh.pop %v2569
        %v2622 = vtanh.pop %v2570
        %v2623 = vld [vmem:[%s286] sm:$0xff]
        %v2624 = vld [vmem:[%s286 + $0x8] sm:$0xff]
        %v2625 = vld [vmem:[%s286 + $0x10] sm:$0xff]
        %v2626 = vld [vmem:[%s286 + $0x18] sm:$0xff]
        %v2627 = vmul.f32 %v2599, %v2623
        %v2628 = vmul.f32 %v2600, %v2624
        %v2629 = vmul.f32 %v2601, %v2625
        %v2630 = vmul.f32 %v2602, %v2626
        %v2631 = vmul.f32 %v2583, %v2619
        %v2632 = vmul.f32 %v2584, %v2620
        %v2633 = vmul.f32 %v2585, %v2621
        %v2634 = vmul.f32 %v2586, %v2622
        %v2635 = vadd.f32 %v2627, %v2631
        %v2636 = vadd.f32 %v2628, %v2632
        %v2637 = vadd.f32 %v2629, %v2633
        %v2638 = vadd.f32 %v2630, %v2634
        %v2639 = vtanh.pop %v2635
        %v2640 = vtanh.pop %v2636
        %v2641 = vtanh.pop %v2637
        %v2642 = vtanh.pop %v2638
        %v2643 = vmul.f32 %v2615, %v2639
        %v2644 = vmul.f32 %v2616, %v2640
        %v2645 = vmul.f32 %v2617, %v2641
        %v2646 = vmul.f32 %v2618, %v2642
        %2647 = vst [vmem:[%s317] sm:$0xff] %v2643
        %2648 = vst [vmem:[%s317 + $0x8] sm:$0xff] %v2644
        %2649 = vst [vmem:[%s317 + $0x10] sm:$0xff] %v2645
        %2650 = vst [vmem:[%s317 + $0x18] sm:$0xff] %v2646
        %2651 = vst [vmem:[%s324] sm:$0xff] %v2635
        %2652 = vst [vmem:[%s324 + $0x8] sm:$0xff] %v2636
        %2653 = vst [vmem:[%s324 + $0x10] sm:$0xff] %v2637
        %2654 = vst [vmem:[%s324 + $0x18] sm:$0xff] %v2638
        %s2655 = sand.u32 %s143, 1
        %s2656 = scalar_lea.sflag [#allocation4], %s2655
        %s2657 = sand.u32 %s143, 1
        %s2658 = smul.addr %s2657, 32
        %s2659 = scalar_lea.vmem [#allocation3], %s2658
        %s2660 = sand.u32 %s171, 1
        %s2661 = scalar_lea.sflag [#allocation6], %s2660
        %s2662 = sand.u32 %s171, 1
        %s2663 = smul.addr %s2662, 32
        %s2664 = scalar_lea.vmem [#allocation5], %s2663
        // Predicated region
        $region75: #{tpu_custom_call.1} parent=69 // pred_check
          %p2665 = pneg %p153
        $region76: #{tpu_custom_call.1} parent=69 // pred_check_branch
          %2667 = sbr.rel (%p2665) target = $region78
        $region77: #{tpu_custom_call.1} parent=69 // pred_region
          %s2669 = ssub.s32 512, 512
          %2670 = vsyncadd %s2656, %s2669
          %s2671 = smul.addr %s27, 8
          %s2672 = sadd.s32 %s28, %s2671
          %s2673 = smul.addr %s2672, 128
          %s2674 = scalar_lea.hbm %s4, %s2673
          %s2675 = sshll.u32 %s2659, 4
          %s2676 = int_to_ptr.vmem [resolvable:$true] %s2675
          %2681 = dma.vmem_to_hbm [thread:$0]  %s2676, 512, %s2674, %s2656, 128, 256, 8
        $region78: #{tpu_custom_call.1} parent=69 // pred_fallthru
          _
        // Predicated region
        $region79: #{tpu_custom_call.1} parent=69 // pred_check
          %p2682 = pneg %p181
        $region80: #{tpu_custom_call.1} parent=69 // pred_check_branch
          %2684 = sbr.rel (%p2682) target = $region82
        $region81: #{tpu_custom_call.1} parent=69 // pred_region
          %s2686 = ssub.s32 512, 512
          %2687 = vsyncadd %s2661, %s2686
          %s2688 = smul.addr %s27, 8
          %s2689 = sadd.s32 %s28, %s2688
          %s2690 = smul.addr %s2689, 128
          %s2691 = scalar_lea.hbm %s5, %s2690
          %s2692 = sshll.u32 %s2664, 4
          %s2693 = int_to_ptr.vmem [resolvable:$true] %s2692
          %2698 = dma.vmem_to_hbm [thread:$0]  %s2693, 512, %s2691, %s2661, 128, 256, 8
        $region82: #{tpu_custom_call.1} parent=69 // pred_fallthru
          _
      $region70: #{tpu_custom_call.1} parent=5 // pred_fallthru
        _
      %p2699 = scmp.le.s32.totalorder 2, %s18
      // Predicated region
      $region83: #{tpu_custom_call.1} parent=5 // pred_check
        %p2700 = pneg %p2699
      $region84: #{tpu_custom_call.1} parent=5 // pred_check_branch
        %2702 = sbr.rel (%p2700) target = $region86
      $region85: #{tpu_custom_call.1} parent=5 // pred_region
        %s2703 = ssub.s32 %s18, 2
        // Predicated region
        $region87: #{tpu_custom_call.1} parent=85 // pred_check
          %p2704 = pneg %p159
        $region88: #{tpu_custom_call.1} parent=85 // pred_check_branch
          %2706 = sbr.rel (%p2704) target = $region90
        $region89: #{tpu_custom_call.1} parent=85 // pred_region
          %s2707 = sand.u32 %s144, 1
          %s2708 = scalar_lea.sflag [#allocation4], %s2707
          %s2709 = sand.u32 %s144, 1
          %s2710 = smul.addr %s2709, 32
          %s2711 = scalar_lea.vmem [#allocation3], %s2710
          %2712 = dma.done %s2708, 512
        $region90: #{tpu_custom_call.1} parent=85 // pred_fallthru
          _
        // Predicated region
        $region91: #{tpu_custom_call.1} parent=85 // pred_check
          %p2713 = pneg %p187
        $region92: #{tpu_custom_call.1} parent=85 // pred_check_branch
          %2715 = sbr.rel (%p2713) target = $region94
        $region93: #{tpu_custom_call.1} parent=85 // pred_region
          %s2716 = sand.u32 %s172, 1
          %s2717 = scalar_lea.sflag [#allocation6], %s2716
          %s2718 = sand.u32 %s172, 1
          %s2719 = smul.addr %s2718, 32
          %s2720 = scalar_lea.vmem [#allocation5], %s2719
          %2721 = dma.done %s2717, 512
        $region94: #{tpu_custom_call.1} parent=85 // pred_fallthru
          _
      $region86: #{tpu_custom_call.1} parent=5 // pred_fallthru
        _
    $region6: #{tpu_custom_call.1} parent=1 // loop_footer
      %s22 = sadd.s32 1, %s18
    $region7: #{tpu_custom_call.1} parent=1 // loop_footer_branch
      %17 = sbr.rel target = $region3
    $region8: #{tpu_custom_call.1} parent=1 // loop_exit
      _
    %2722 = vsyncpa [#allocation4], 1
    %s2723 = scalar_lea.sflag [#allocation4], 1
    %2724 = vsyncpa %s2723, 1
    %2725 = vsyncpa [#allocation6], 1
    %s2726 = scalar_lea.sflag [#allocation6], 1
    %2727 = vsyncpa %s2726, 1

</llo_original>
